<compile_context>
chip_gen: v6e
topology: v6e:2x2x1
jax: 0.10.0
libtpu: 0.0.40
codegen_flags: <defaults>
</compile_context>

<pallas_src>
import math

import jax
import jax.numpy as jnp
from jax.experimental import pallas as pl
from jax.experimental.pallas import tpu as pltpu

_LOG2 = 0.6931471805599453


def _shifted_softplus(x):
    # softplus(x) - log(2), numerically stable; pure elementwise (VPU + EUP).
    return jnp.maximum(x, 0.0) + jnp.log1p(jnp.exp(-jnp.abs(x))) - _LOG2


def _tiled_mlp_kernel(x_ref, w1_ref, b1_ref, w2_ref, b2_ref, w3_ref, b3_ref,
                      out_ref):
    """One row-tile of the TiledMultiLayerNN forward.

    x_ref:   (TM, n_in)             f32
    w1_ref:  (n_tiles, n_in, H)     f32    b1_ref: (n_tiles, 1, H)
    w2_ref:  (n_tiles, H, H)        f32    b2_ref: (n_tiles, 1, H)
    w3_ref:  (n_tiles, H, n_out)    f32    b3_ref: (n_tiles, 1, n_out)
    out_ref: (TM, n_tiles * n_out)  f32
    """
    x = x_ref[...]
    n_tiles = w1_ref.shape[0]
    n_out = w3_ref.shape[2]
    for t in range(n_tiles):  # static unroll; n_tiles is small
        h = jnp.dot(x, w1_ref[t], preferred_element_type=jnp.float32) + b1_ref[t]
        h = _shifted_softplus(h)
        h = jnp.dot(h, w2_ref[t], preferred_element_type=jnp.float32) + b2_ref[t]
        h = _shifted_softplus(h)
        y = jnp.dot(h, w3_ref[t], preferred_element_type=jnp.float32) + b3_ref[t]
        out_ref[:, t * n_out:(t + 1) * n_out] = y.astype(out_ref.dtype)


def _round_up(x, m):
    return ((x + m - 1) // m) * m


def tiled_multilayer_nn_forward(x, params, *, tm_max=1024):
    """Pallas forward for TiledMultiLayerNN.

    x:      [B, Natoms, n_in] float32
    params: (W1 [T,n_in,H], b1 [T,1,H], W2 [T,H,H], b2 [T,1,H],
             W3 [T,H,n_out], b3 [T,1,n_out])
            Weights stored input-major (y = x @ W + b), i.e. the transpose of
            torch.nn.Linear.weight.
    returns [B, Natoms, T * n_out] float32
    """
    w1, b1, w2, b2, w3, b3 = params
    B, natoms, n_in = x.shape
    n_tiles, _, n_hidden = w1.shape
    n_out = w3.shape[2]

    M = B * natoms
    x2 = x.reshape(M, n_in).astype(jnp.float32)

    # Row tile: large enough to amortize per-step overhead, small enough to
    # keep the double-buffered working set well under VMEM even on v7x.
    tm = min(tm_max, _round_up(M, 8))
    m_pad = _round_up(M, tm)
    if m_pad != M:
        x2 = jnp.pad(x2, ((0, m_pad - M), (0, 0)))

    grid = (m_pad // tm,)

    out = pl.pallas_call(
        _tiled_mlp_kernel,
        out_shape=jax.ShapeDtypeStruct((m_pad, n_tiles * n_out), jnp.float32),
        grid_spec=pltpu.PrefetchScalarGridSpec(
            num_scalar_prefetch=0,
            grid=grid,
            in_specs=[
                # activations: tiled along rows
                pl.BlockSpec((tm, n_in), lambda i: (i, 0)),
                # weights / biases: full-array blocks, resident in VMEM
                pl.BlockSpec((n_tiles, n_in, n_hidden), lambda i: (0, 0, 0)),
                pl.BlockSpec((n_tiles, 1, n_hidden), lambda i: (0, 0, 0)),
                pl.BlockSpec((n_tiles, n_hidden, n_hidden), lambda i: (0, 0, 0)),
                pl.BlockSpec((n_tiles, 1, n_hidden), lambda i: (0, 0, 0)),
                pl.BlockSpec((n_tiles, n_hidden, n_out), lambda i: (0, 0, 0)),
                pl.BlockSpec((n_tiles, 1, n_out), lambda i: (0, 0, 0)),
            ],
            out_specs=pl.BlockSpec((tm, n_tiles * n_out), lambda i: (i, 0)),
        ),
        compiler_params=pltpu.CompilerParams(
            dimension_semantics=("parallel",)),
    )(x2, w1, b1, w2, b2, w3, b3)

    return out[:M].reshape(B, natoms, n_tiles * n_out)


def init_params(key, n_in, n_out, n_tiles, n_hidden):
    """PyTorch-Linear-style uniform init, stacked over tiles."""
    ks = jax.random.split(key, 6)

    def u(k, shape, fan_in):
        bound = 1.0 / math.sqrt(fan_in)
        return jax.random.uniform(k, shape, jnp.float32, -bound, bound)

    w1 = u(ks[0], (n_tiles, n_in, n_hidden), n_in)
    b1 = u(ks[1], (n_tiles, 1, n_hidden), n_in)
    w2 = u(ks[2], (n_tiles, n_hidden, n_hidden), n_hidden)
    b2 = u(ks[3], (n_tiles, 1, n_hidden), n_hidden)
    w3 = u(ks[4], (n_tiles, n_hidden, n_out), n_hidden)
    b3 = u(ks[5], (n_tiles, 1, n_out), n_hidden)
    return w1, b1, w2, b2, w3, b3


def reference_forward(x, params):
    """Pure-JAX reference mirroring the PyTorch module semantics."""
    w1, b1, w2, b2, w3, b3 = params
    hp = jax.lax.Precision.HIGHEST
    outs = []
    for t in range(w1.shape[0]):
        h = _shifted_softplus(jnp.dot(x, w1[t], precision=hp) + b1[t, 0])
        h = _shifted_softplus(jnp.dot(h, w2[t], precision=hp) + b2[t, 0])
        outs.append(jnp.dot(h, w3[t], precision=hp) + b3[t, 0])
    return jnp.concatenate(outs, axis=-1)


if __name__ == "__main__":
    # Small shapes consistent with the module: batch=2, natoms=8, n_in=32,
    # n_hidden=32, n_out=1, n_tiles=4 (element-dependent BP-style networks).
    B, natoms = 2, 8
    n_in, n_hidden, n_out, n_tiles = 32, 32, 1, 4

    key = jax.random.PRNGKey(0)
    kx, kp = jax.random.split(key)
    x = jax.random.normal(kx, (B, natoms, n_in), jnp.float32)
    params = init_params(kp, n_in, n_out, n_tiles, n_hidden)

    out = tiled_multilayer_nn_forward(x, params)
    out = jax.block_until_ready(out)

    ref = reference_forward(x, params)
    assert out.shape == (B, natoms, n_tiles * n_out), out.shape
    max_err = jnp.max(jnp.abs(out - ref))
    assert jnp.allclose(out, ref, atol=1e-3, rtol=1e-3), (
        f"Pallas TiledMultiLayerNN mismatch vs reference, max abs err {max_err}")

    print("KERNEL_OK")
</pallas_src>

<mosaic_0001>
module attributes {stable_mosaic.version = 11 : i64} {
  func.func @_tiled_mlp_kernel(%arg0: i32, %arg1: memref<16x32xf32, #tpu.memory_space<vmem>>, %arg2: memref<4x32x32xf32, #tpu.memory_space<vmem>>, %arg3: memref<4x1x32xf32, #tpu.memory_space<vmem>>, %arg4: memref<4x32x32xf32, #tpu.memory_space<vmem>>, %arg5: memref<4x1x32xf32, #tpu.memory_space<vmem>>, %arg6: memref<4x32x1xf32, #tpu.memory_space<vmem>>, %arg7: memref<4x1x1xf32, #tpu.memory_space<vmem>>, %arg8: memref<16x4xf32, #tpu.memory_space<vmem>>) attributes {dimension_semantics = [#tpu.dimension_semantics<parallel>], iteration_bounds = array<i64: 1>, scalar_prefetch = 0 : i64, scratch_operands = 0 : i64, tpu.core_type = #tpu.core_type<tc>, window_params = [{transform_indices = @transform_0, window_bounds = array<i64: 16, 32>}, {pipeline_mode = #tpu.pipeline_mode<synchronous>, transform_indices = @transform_1, window_bounds = array<i64: 4, 32, 32>}, {pipeline_mode = #tpu.pipeline_mode<synchronous>, transform_indices = @transform_2, window_bounds = array<i64: 4, 1, 32>}, {pipeline_mode = #tpu.pipeline_mode<synchronous>, transform_indices = @transform_3, window_bounds = array<i64: 4, 32, 32>}, {pipeline_mode = #tpu.pipeline_mode<synchronous>, transform_indices = @transform_4, window_bounds = array<i64: 4, 1, 32>}, {pipeline_mode = #tpu.pipeline_mode<synchronous>, transform_indices = @transform_5, window_bounds = array<i64: 4, 32, 1>}, {pipeline_mode = #tpu.pipeline_mode<synchronous>, transform_indices = @transform_6, window_bounds = array<i64: 4, 1, 1>}, {transform_indices = @transform_7, window_bounds = array<i64: 16, 4>}]} {
    %c0 = arith.constant 0 : index
    %c0_0 = arith.constant 0 : index
    %0 = vector.load %arg1[%c0, %c0_0] : memref<16x32xf32, #tpu.memory_space<vmem>>, vector<16x32xf32>
    %c0_1 = arith.constant 0 : index
    %c0_2 = arith.constant 0 : index
    %c0_3 = arith.constant 0 : index
    %1 = vector.load %arg2[%c0_1, %c0_2, %c0_3] : memref<4x32x32xf32, #tpu.memory_space<vmem>>, vector<1x32x32xf32>
    %2 = vector.shape_cast %1 : vector<1x32x32xf32> to vector<32x32xf32>
    %cst = arith.constant dense<0.000000e+00> : vector<16x32xf32>
    %3 = tpu.matmul %0, %2, %cst {dimension_numbers = #tpu.dot_dimension_numbers<[1], [0], [0], [1], [0, 0, 1, 1], [], []>} : vector<16x32xf32>, vector<32x32xf32>, vector<16x32xf32> -> vector<16x32xf32>
    %c0_4 = arith.constant 0 : index
    %c0_5 = arith.constant 0 : index
    %c0_6 = arith.constant 0 : index
    %4 = vector.load %arg3[%c0_4, %c0_5, %c0_6] : memref<4x1x32xf32, #tpu.memory_space<vmem>>, vector<1x1x32xf32>
    %5 = vector.shape_cast %4 : vector<1x1x32xf32> to vector<1x32xf32>
    %6 = vector.broadcast %5 : vector<1x32xf32> to vector<16x32xf32>
    %7 = arith.addf %3, %6 : vector<16x32xf32>
    %cst_7 = arith.constant 0.000000e+00 : f32
    %8 = vector.broadcast %cst_7 : f32 to vector<16x32xf32>
    %9 = arith.maximumf %7, %8 : vector<16x32xf32>
    %10 = math.absf %7 : vector<16x32xf32>
    %cst_8 = arith.constant 0.000000e+00 : f32
    %11 = vector.broadcast %cst_8 : f32 to vector<16x32xf32>
    %12 = arith.subf %11, %10 : vector<16x32xf32>
    %13 = math.exp %12 : vector<16x32xf32>
    %14 = math.log1p %13 : vector<16x32xf32>
    %15 = arith.addf %9, %14 : vector<16x32xf32>
    %cst_9 = arith.constant 0.693147182 : f32
    %16 = vector.broadcast %cst_9 : f32 to vector<16x32xf32>
    %17 = arith.subf %15, %16 : vector<16x32xf32>
    %c0_10 = arith.constant 0 : index
    %c0_11 = arith.constant 0 : index
    %c0_12 = arith.constant 0 : index
    %18 = vector.load %arg4[%c0_10, %c0_11, %c0_12] : memref<4x32x32xf32, #tpu.memory_space<vmem>>, vector<1x32x32xf32>
    %19 = vector.shape_cast %18 : vector<1x32x32xf32> to vector<32x32xf32>
    %cst_13 = arith.constant dense<0.000000e+00> : vector<16x32xf32>
    %20 = tpu.matmul %17, %19, %cst_13 {dimension_numbers = #tpu.dot_dimension_numbers<[1], [0], [0], [1], [0, 0, 1, 1], [], []>} : vector<16x32xf32>, vector<32x32xf32>, vector<16x32xf32> -> vector<16x32xf32>
    %c0_14 = arith.constant 0 : index
    %c0_15 = arith.constant 0 : index
    %c0_16 = arith.constant 0 : index
    %21 = vector.load %arg5[%c0_14, %c0_15, %c0_16] : memref<4x1x32xf32, #tpu.memory_space<vmem>>, vector<1x1x32xf32>
    %22 = vector.shape_cast %21 : vector<1x1x32xf32> to vector<1x32xf32>
    %23 = vector.broadcast %22 : vector<1x32xf32> to vector<16x32xf32>
    %24 = arith.addf %20, %23 : vector<16x32xf32>
    %cst_17 = arith.constant 0.000000e+00 : f32
    %25 = vector.broadcast %cst_17 : f32 to vector<16x32xf32>
    %26 = arith.maximumf %24, %25 : vector<16x32xf32>
    %27 = math.absf %24 : vector<16x32xf32>
    %cst_18 = arith.constant 0.000000e+00 : f32
    %28 = vector.broadcast %cst_18 : f32 to vector<16x32xf32>
    %29 = arith.subf %28, %27 : vector<16x32xf32>
    %30 = math.exp %29 : vector<16x32xf32>
    %31 = math.log1p %30 : vector<16x32xf32>
    %32 = arith.addf %26, %31 : vector<16x32xf32>
    %cst_19 = arith.constant 0.693147182 : f32
    %33 = vector.broadcast %cst_19 : f32 to vector<16x32xf32>
    %34 = arith.subf %32, %33 : vector<16x32xf32>
    %c0_20 = arith.constant 0 : index
    %c0_21 = arith.constant 0 : index
    %c0_22 = arith.constant 0 : index
    %35 = vector.load %arg6[%c0_20, %c0_21, %c0_22] : memref<4x32x1xf32, #tpu.memory_space<vmem>>, vector<1x32x1xf32>
    %36 = vector.shape_cast %35 : vector<1x32x1xf32> to vector<32x1xf32>
    %cst_23 = arith.constant dense<0.000000e+00> : vector<16x1xf32>
    %37 = tpu.matmul %34, %36, %cst_23 {dimension_numbers = #tpu.dot_dimension_numbers<[1], [0], [0], [1], [0, 0, 1, 1], [], []>} : vector<16x32xf32>, vector<32x1xf32>, vector<16x1xf32> -> vector<16x1xf32>
    %c0_24 = arith.constant 0 : index
    %c0_25 = arith.constant 0 : index
    %c0_26 = arith.constant 0 : index
    %38 = vector.load %arg7[%c0_24, %c0_25, %c0_26] : memref<4x1x1xf32, #tpu.memory_space<vmem>>, vector<1x1x1xf32>
    %39 = vector.shape_cast %38 : vector<1x1x1xf32> to vector<1x1xf32>
    %40 = vector.broadcast %39 : vector<1x1xf32> to vector<16x1xf32>
    %41 = arith.addf %37, %40 : vector<16x1xf32>
    %c0_27 = arith.constant 0 : index
    %c0_28 = arith.constant 0 : index
    %42 = vector.load %arg8[%c0_27, %c0_28] : memref<16x4xf32, #tpu.memory_space<vmem>>, vector<16x1xf32>
    tpu.vector_store %arg8[%c0_27, %c0_28], %41 {strides = array<i32>} : memref<16x4xf32, #tpu.memory_space<vmem>>, vector<16x1xf32>,
    %c1 = arith.constant 1 : index
    %c0_29 = arith.constant 0 : index
    %c0_30 = arith.constant 0 : index
    %43 = vector.load %arg2[%c1, %c0_29, %c0_30] : memref<4x32x32xf32, #tpu.memory_space<vmem>>, vector<1x32x32xf32>
    %44 = vector.shape_cast %43 : vector<1x32x32xf32> to vector<32x32xf32>
    %cst_31 = arith.constant dense<0.000000e+00> : vector<16x32xf32>
    %45 = tpu.matmul %0, %44, %cst_31 {dimension_numbers = #tpu.dot_dimension_numbers<[1], [0], [0], [1], [0, 0, 1, 1], [], []>} : vector<16x32xf32>, vector<32x32xf32>, vector<16x32xf32> -> vector<16x32xf32>
    %c1_32 = arith.constant 1 : index
    %c0_33 = arith.constant 0 : index
    %c0_34 = arith.constant 0 : index
    %46 = vector.load %arg3[%c1_32, %c0_33, %c0_34] : memref<4x1x32xf32, #tpu.memory_space<vmem>>, vector<1x1x32xf32>
    %47 = vector.shape_cast %46 : vector<1x1x32xf32> to vector<1x32xf32>
    %48 = vector.broadcast %47 : vector<1x32xf32> to vector<16x32xf32>
    %49 = arith.addf %45, %48 : vector<16x32xf32>
    %cst_35 = arith.constant 0.000000e+00 : f32
    %50 = vector.broadcast %cst_35 : f32 to vector<16x32xf32>
    %51 = arith.maximumf %49, %50 : vector<16x32xf32>
    %52 = math.absf %49 : vector<16x32xf32>
    %cst_36 = arith.constant 0.000000e+00 : f32
    %53 = vector.broadcast %cst_36 : f32 to vector<16x32xf32>
    %54 = arith.subf %53, %52 : vector<16x32xf32>
    %55 = math.exp %54 : vector<16x32xf32>
    %56 = math.log1p %55 : vector<16x32xf32>
    %57 = arith.addf %51, %56 : vector<16x32xf32>
    %cst_37 = arith.constant 0.693147182 : f32
    %58 = vector.broadcast %cst_37 : f32 to vector<16x32xf32>
    %59 = arith.subf %57, %58 : vector<16x32xf32>
    %c1_38 = arith.constant 1 : index
    %c0_39 = arith.constant 0 : index
    %c0_40 = arith.constant 0 : index
    %60 = vector.load %arg4[%c1_38, %c0_39, %c0_40] : memref<4x32x32xf32, #tpu.memory_space<vmem>>, vector<1x32x32xf32>
    %61 = vector.shape_cast %60 : vector<1x32x32xf32> to vector<32x32xf32>
    %cst_41 = arith.constant dense<0.000000e+00> : vector<16x32xf32>
    %62 = tpu.matmul %59, %61, %cst_41 {dimension_numbers = #tpu.dot_dimension_numbers<[1], [0], [0], [1], [0, 0, 1, 1], [], []>} : vector<16x32xf32>, vector<32x32xf32>, vector<16x32xf32> -> vector<16x32xf32>
    %c1_42 = arith.constant 1 : index
    %c0_43 = arith.constant 0 : index
    %c0_44 = arith.constant 0 : index
    %63 = vector.load %arg5[%c1_42, %c0_43, %c0_44] : memref<4x1x32xf32, #tpu.memory_space<vmem>>, vector<1x1x32xf32>
    %64 = vector.shape_cast %63 : vector<1x1x32xf32> to vector<1x32xf32>
    %65 = vector.broadcast %64 : vector<1x32xf32> to vector<16x32xf32>
    %66 = arith.addf %62, %65 : vector<16x32xf32>
    %cst_45 = arith.constant 0.000000e+00 : f32
    %67 = vector.broadcast %cst_45 : f32 to vector<16x32xf32>
    %68 = arith.maximumf %66, %67 : vector<16x32xf32>
    %69 = math.absf %66 : vector<16x32xf32>
    %cst_46 = arith.constant 0.000000e+00 : f32
    %70 = vector.broadcast %cst_46 : f32 to vector<16x32xf32>
    %71 = arith.subf %70, %69 : vector<16x32xf32>
    %72 = math.exp %71 : vector<16x32xf32>
    %73 = math.log1p %72 : vector<16x32xf32>
    %74 = arith.addf %68, %73 : vector<16x32xf32>
    %cst_47 = arith.constant 0.693147182 : f32
    %75 = vector.broadcast %cst_47 : f32 to vector<16x32xf32>
    %76 = arith.subf %74, %75 : vector<16x32xf32>
    %c1_48 = arith.constant 1 : index
    %c0_49 = arith.constant 0 : index
    %c0_50 = arith.constant 0 : index
    %77 = vector.load %arg6[%c1_48, %c0_49, %c0_50] : memref<4x32x1xf32, #tpu.memory_space<vmem>>, vector<1x32x1xf32>
    %78 = vector.shape_cast %77 : vector<1x32x1xf32> to vector<32x1xf32>
    %cst_51 = arith.constant dense<0.000000e+00> : vector<16x1xf32>
    %79 = tpu.matmul %76, %78, %cst_51 {dimension_numbers = #tpu.dot_dimension_numbers<[1], [0], [0], [1], [0, 0, 1, 1], [], []>} : vector<16x32xf32>, vector<32x1xf32>, vector<16x1xf32> -> vector<16x1xf32>
    %c1_52 = arith.constant 1 : index
    %c0_53 = arith.constant 0 : index
    %c0_54 = arith.constant 0 : index
    %80 = vector.load %arg7[%c1_52, %c0_53, %c0_54] : memref<4x1x1xf32, #tpu.memory_space<vmem>>, vector<1x1x1xf32>
    %81 = vector.shape_cast %80 : vector<1x1x1xf32> to vector<1x1xf32>
    %82 = vector.broadcast %81 : vector<1x1xf32> to vector<16x1xf32>
    %83 = arith.addf %79, %82 : vector<16x1xf32>
    %c0_55 = arith.constant 0 : index
    %c1_56 = arith.constant 1 : index
    %84 = vector.load %arg8[%c0_55, %c1_56] : memref<16x4xf32, #tpu.memory_space<vmem>>, vector<16x1xf32>
    tpu.vector_store %arg8[%c0_55, %c1_56], %83 {strides = array<i32>} : memref<16x4xf32, #tpu.memory_space<vmem>>, vector<16x1xf32>,
    %c2 = arith.constant 2 : index
    %c0_57 = arith.constant 0 : index
    %c0_58 = arith.constant 0 : index
    %85 = vector.load %arg2[%c2, %c0_57, %c0_58] : memref<4x32x32xf32, #tpu.memory_space<vmem>>, vector<1x32x32xf32>
    %86 = vector.shape_cast %85 : vector<1x32x32xf32> to vector<32x32xf32>
    %cst_59 = arith.constant dense<0.000000e+00> : vector<16x32xf32>
    %87 = tpu.matmul %0, %86, %cst_59 {dimension_numbers = #tpu.dot_dimension_numbers<[1], [0], [0], [1], [0, 0, 1, 1], [], []>} : vector<16x32xf32>, vector<32x32xf32>, vector<16x32xf32> -> vector<16x32xf32>
    %c2_60 = arith.constant 2 : index
    %c0_61 = arith.constant 0 : index
    %c0_62 = arith.constant 0 : index
    %88 = vector.load %arg3[%c2_60, %c0_61, %c0_62] : memref<4x1x32xf32, #tpu.memory_space<vmem>>, vector<1x1x32xf32>
    %89 = vector.shape_cast %88 : vector<1x1x32xf32> to vector<1x32xf32>
    %90 = vector.broadcast %89 : vector<1x32xf32> to vector<16x32xf32>
    %91 = arith.addf %87, %90 : vector<16x32xf32>
    %cst_63 = arith.constant 0.000000e+00 : f32
    %92 = vector.broadcast %cst_63 : f32 to vector<16x32xf32>
    %93 = arith.maximumf %91, %92 : vector<16x32xf32>
    %94 = math.absf %91 : vector<16x32xf32>
    %cst_64 = arith.constant 0.000000e+00 : f32
    %95 = vector.broadcast %cst_64 : f32 to vector<16x32xf32>
    %96 = arith.subf %95, %94 : vector<16x32xf32>
    %97 = math.exp %96 : vector<16x32xf32>
    %98 = math.log1p %97 : vector<16x32xf32>
    %99 = arith.addf %93, %98 : vector<16x32xf32>
    %cst_65 = arith.constant 0.693147182 : f32
    %100 = vector.broadcast %cst_65 : f32 to vector<16x32xf32>
    %101 = arith.subf %99, %100 : vector<16x32xf32>
    %c2_66 = arith.constant 2 : index
    %c0_67 = arith.constant 0 : index
    %c0_68 = arith.constant 0 : index
    %102 = vector.load %arg4[%c2_66, %c0_67, %c0_68] : memref<4x32x32xf32, #tpu.memory_space<vmem>>, vector<1x32x32xf32>
    %103 = vector.shape_cast %102 : vector<1x32x32xf32> to vector<32x32xf32>
    %cst_69 = arith.constant dense<0.000000e+00> : vector<16x32xf32>
    %104 = tpu.matmul %101, %103, %cst_69 {dimension_numbers = #tpu.dot_dimension_numbers<[1], [0], [0], [1], [0, 0, 1, 1], [], []>} : vector<16x32xf32>, vector<32x32xf32>, vector<16x32xf32> -> vector<16x32xf32>
    %c2_70 = arith.constant 2 : index
    %c0_71 = arith.constant 0 : index
    %c0_72 = arith.constant 0 : index
    %105 = vector.load %arg5[%c2_70, %c0_71, %c0_72] : memref<4x1x32xf32, #tpu.memory_space<vmem>>, vector<1x1x32xf32>
    %106 = vector.shape_cast %105 : vector<1x1x32xf32> to vector<1x32xf32>
    %107 = vector.broadcast %106 : vector<1x32xf32> to vector<16x32xf32>
    %108 = arith.addf %104, %107 : vector<16x32xf32>
    %cst_73 = arith.constant 0.000000e+00 : f32
    %109 = vector.broadcast %cst_73 : f32 to vector<16x32xf32>
    %110 = arith.maximumf %108, %109 : vector<16x32xf32>
    %111 = math.absf %108 : vector<16x32xf32>
    %cst_74 = arith.constant 0.000000e+00 : f32
    %112 = vector.broadcast %cst_74 : f32 to vector<16x32xf32>
    %113 = arith.subf %112, %111 : vector<16x32xf32>
    %114 = math.exp %113 : vector<16x32xf32>
    %115 = math.log1p %114 : vector<16x32xf32>
    %116 = arith.addf %110, %115 : vector<16x32xf32>
    %cst_75 = arith.constant 0.693147182 : f32
    %117 = vector.broadcast %cst_75 : f32 to vector<16x32xf32>
    %118 = arith.subf %116, %117 : vector<16x32xf32>
    %c2_76 = arith.constant 2 : index
    %c0_77 = arith.constant 0 : index
    %c0_78 = arith.constant 0 : index
    %119 = vector.load %arg6[%c2_76, %c0_77, %c0_78] : memref<4x32x1xf32, #tpu.memory_space<vmem>>, vector<1x32x1xf32>
    %120 = vector.shape_cast %119 : vector<1x32x1xf32> to vector<32x1xf32>
    %cst_79 = arith.constant dense<0.000000e+00> : vector<16x1xf32>
    %121 = tpu.matmul %118, %120, %cst_79 {dimension_numbers = #tpu.dot_dimension_numbers<[1], [0], [0], [1], [0, 0, 1, 1], [], []>} : vector<16x32xf32>, vector<32x1xf32>, vector<16x1xf32> -> vector<16x1xf32>
    %c2_80 = arith.constant 2 : index
    %c0_81 = arith.constant 0 : index
    %c0_82 = arith.constant 0 : index
    %122 = vector.load %arg7[%c2_80, %c0_81, %c0_82] : memref<4x1x1xf32, #tpu.memory_space<vmem>>, vector<1x1x1xf32>
    %123 = vector.shape_cast %122 : vector<1x1x1xf32> to vector<1x1xf32>
    %124 = vector.broadcast %123 : vector<1x1xf32> to vector<16x1xf32>
    %125 = arith.addf %121, %124 : vector<16x1xf32>
    %c0_83 = arith.constant 0 : index
    %c2_84 = arith.constant 2 : index
    %126 = vector.load %arg8[%c0_83, %c2_84] : memref<16x4xf32, #tpu.memory_space<vmem>>, vector<16x1xf32>
    tpu.vector_store %arg8[%c0_83, %c2_84], %125 {strides = array<i32>} : memref<16x4xf32, #tpu.memory_space<vmem>>, vector<16x1xf32>,
    %c3 = arith.constant 3 : index
    %c0_85 = arith.constant 0 : index
    %c0_86 = arith.constant 0 : index
    %127 = vector.load %arg2[%c3, %c0_85, %c0_86] : memref<4x32x32xf32, #tpu.memory_space<vmem>>, vector<1x32x32xf32>
    %128 = vector.shape_cast %127 : vector<1x32x32xf32> to vector<32x32xf32>
    %cst_87 = arith.constant dense<0.000000e+00> : vector<16x32xf32>
    %129 = tpu.matmul %0, %128, %cst_87 {dimension_numbers = #tpu.dot_dimension_numbers<[1], [0], [0], [1], [0, 0, 1, 1], [], []>} : vector<16x32xf32>, vector<32x32xf32>, vector<16x32xf32> -> vector<16x32xf32>
    %c3_88 = arith.constant 3 : index
    %c0_89 = arith.constant 0 : index
    %c0_90 = arith.constant 0 : index
    %130 = vector.load %arg3[%c3_88, %c0_89, %c0_90] : memref<4x1x32xf32, #tpu.memory_space<vmem>>, vector<1x1x32xf32>
    %131 = vector.shape_cast %130 : vector<1x1x32xf32> to vector<1x32xf32>
    %132 = vector.broadcast %131 : vector<1x32xf32> to vector<16x32xf32>
    %133 = arith.addf %129, %132 : vector<16x32xf32>
    %cst_91 = arith.constant 0.000000e+00 : f32
    %134 = vector.broadcast %cst_91 : f32 to vector<16x32xf32>
    %135 = arith.maximumf %133, %134 : vector<16x32xf32>
    %136 = math.absf %133 : vector<16x32xf32>
    %cst_92 = arith.constant 0.000000e+00 : f32
    %137 = vector.broadcast %cst_92 : f32 to vector<16x32xf32>
    %138 = arith.subf %137, %136 : vector<16x32xf32>
    %139 = math.exp %138 : vector<16x32xf32>
    %140 = math.log1p %139 : vector<16x32xf32>
    %141 = arith.addf %135, %140 : vector<16x32xf32>
    %cst_93 = arith.constant 0.693147182 : f32
    %142 = vector.broadcast %cst_93 : f32 to vector<16x32xf32>
    %143 = arith.subf %141, %142 : vector<16x32xf32>
    %c3_94 = arith.constant 3 : index
    %c0_95 = arith.constant 0 : index
    %c0_96 = arith.constant 0 : index
    %144 = vector.load %arg4[%c3_94, %c0_95, %c0_96] : memref<4x32x32xf32, #tpu.memory_space<vmem>>, vector<1x32x32xf32>
    %145 = vector.shape_cast %144 : vector<1x32x32xf32> to vector<32x32xf32>
    %cst_97 = arith.constant dense<0.000000e+00> : vector<16x32xf32>
    %146 = tpu.matmul %143, %145, %cst_97 {dimension_numbers = #tpu.dot_dimension_numbers<[1], [0], [0], [1], [0, 0, 1, 1], [], []>} : vector<16x32xf32>, vector<32x32xf32>, vector<16x32xf32> -> vector<16x32xf32>
    %c3_98 = arith.constant 3 : index
    %c0_99 = arith.constant 0 : index
    %c0_100 = arith.constant 0 : index
    %147 = vector.load %arg5[%c3_98, %c0_99, %c0_100] : memref<4x1x32xf32, #tpu.memory_space<vmem>>, vector<1x1x32xf32>
    %148 = vector.shape_cast %147 : vector<1x1x32xf32> to vector<1x32xf32>
    %149 = vector.broadcast %148 : vector<1x32xf32> to vector<16x32xf32>
    %150 = arith.addf %146, %149 : vector<16x32xf32>
    %cst_101 = arith.constant 0.000000e+00 : f32
    %151 = vector.broadcast %cst_101 : f32 to vector<16x32xf32>
    %152 = arith.maximumf %150, %151 : vector<16x32xf32>
    %153 = math.absf %150 : vector<16x32xf32>
    %cst_102 = arith.constant 0.000000e+00 : f32
    %154 = vector.broadcast %cst_102 : f32 to vector<16x32xf32>
    %155 = arith.subf %154, %153 : vector<16x32xf32>
    %156 = math.exp %155 : vector<16x32xf32>
    %157 = math.log1p %156 : vector<16x32xf32>
    %158 = arith.addf %152, %157 : vector<16x32xf32>
    %cst_103 = arith.constant 0.693147182 : f32
    %159 = vector.broadcast %cst_103 : f32 to vector<16x32xf32>
    %160 = arith.subf %158, %159 : vector<16x32xf32>
    %c3_104 = arith.constant 3 : index
    %c0_105 = arith.constant 0 : index
    %c0_106 = arith.constant 0 : index
    %161 = vector.load %arg6[%c3_104, %c0_105, %c0_106] : memref<4x32x1xf32, #tpu.memory_space<vmem>>, vector<1x32x1xf32>
    %162 = vector.shape_cast %161 : vector<1x32x1xf32> to vector<32x1xf32>
    %cst_107 = arith.constant dense<0.000000e+00> : vector<16x1xf32>
    %163 = tpu.matmul %160, %162, %cst_107 {dimension_numbers = #tpu.dot_dimension_numbers<[1], [0], [0], [1], [0, 0, 1, 1], [], []>} : vector<16x32xf32>, vector<32x1xf32>, vector<16x1xf32> -> vector<16x1xf32>
    %c3_108 = arith.constant 3 : index
    %c0_109 = arith.constant 0 : index
    %c0_110 = arith.constant 0 : index
    %164 = vector.load %arg7[%c3_108, %c0_109, %c0_110] : memref<4x1x1xf32, #tpu.memory_space<vmem>>, vector<1x1x1xf32>
    %165 = vector.shape_cast %164 : vector<1x1x1xf32> to vector<1x1xf32>
    %166 = vector.broadcast %165 : vector<1x1xf32> to vector<16x1xf32>
    %167 = arith.addf %163, %166 : vector<16x1xf32>
    %c0_111 = arith.constant 0 : index
    %c3_112 = arith.constant 3 : index
    %168 = vector.load %arg8[%c0_111, %c3_112] : memref<16x4xf32, #tpu.memory_space<vmem>>, vector<16x1xf32>
    tpu.vector_store %arg8[%c0_111, %c3_112], %167 {strides = array<i32>} : memref<16x4xf32, #tpu.memory_space<vmem>>, vector<16x1xf32>,
    return
  }
  func.func @transform_0(%arg0: i32) -> (i32, i32) {
    %c0_i32 = arith.constant 0 : i32
    %c0_i32_0 = arith.constant 0 : i32
    return %arg0, %c0_i32 : i32, i32
  }
  func.func @transform_1(%arg0: i32) -> (i32, i32, i32) {
    %c0_i32 = arith.constant 0 : i32
    %c0_i32_0 = arith.constant 0 : i32
    %c0_i32_1 = arith.constant 0 : i32
    %c0_i32_2 = arith.constant 0 : i32
    return %c0_i32, %c0_i32_0, %c0_i32_1 : i32, i32, i32
  }
  func.func @transform_2(%arg0: i32) -> (i32, i32, i32) {
    %c0_i32 = arith.constant 0 : i32
    %c0_i32_0 = arith.constant 0 : i32
    %c0_i32_1 = arith.constant 0 : i32
    %c0_i32_2 = arith.constant 0 : i32
    return %c0_i32, %c0_i32_0, %c0_i32_1 : i32, i32, i32
  }
  func.func @transform_3(%arg0: i32) -> (i32, i32, i32) {
    %c0_i32 = arith.constant 0 : i32
    %c0_i32_0 = arith.constant 0 : i32
    %c0_i32_1 = arith.constant 0 : i32
    %c0_i32_2 = arith.constant 0 : i32
    return %c0_i32, %c0_i32_0, %c0_i32_1 : i32, i32, i32
  }
  func.func @transform_4(%arg0: i32) -> (i32, i32, i32) {
    %c0_i32 = arith.constant 0 : i32
    %c0_i32_0 = arith.constant 0 : i32
    %c0_i32_1 = arith.constant 0 : i32
    %c0_i32_2 = arith.constant 0 : i32
    return %c0_i32, %c0_i32_0, %c0_i32_1 : i32, i32, i32
  }
  func.func @transform_5(%arg0: i32) -> (i32, i32, i32) {
    %c0_i32 = arith.constant 0 : i32
    %c0_i32_0 = arith.constant 0 : i32
    %c0_i32_1 = arith.constant 0 : i32
    %c0_i32_2 = arith.constant 0 : i32
    return %c0_i32, %c0_i32_0, %c0_i32_1 : i32, i32, i32
  }
  func.func @transform_6(%arg0: i32) -> (i32, i32, i32) {
    %c0_i32 = arith.constant 0 : i32
    %c0_i32_0 = arith.constant 0 : i32
    %c0_i32_1 = arith.constant 0 : i32
    %c0_i32_2 = arith.constant 0 : i32
    return %c0_i32, %c0_i32_0, %c0_i32_1 : i32, i32, i32
  }
  func.func @transform_7(%arg0: i32) -> (i32, i32) {
    %c0_i32 = arith.constant 0 : i32
    %c0_i32_0 = arith.constant 0 : i32
    return %arg0, %c0_i32 : i32, i32
  }
}

</mosaic_0001>

<llo_original>
// kernel: tpu_custom_call.1
$region0: #{tpu_custom_call.1}
  #allocation0 [shape = 'u32[]', space=smem, size = 0x4, offset = 0x4, fixed_abs, tag = 'smem constant byte address 0x4 - core index']
  #allocation1 [shape = 'u32[144,128]{1,0:T(1,128)}', space=vmem, size = 0x12000, scoped, tag = 'internal scratch']
  %s0 = inlined_call_operand.hbm [shape: f32[16,32], index: 0, kind: input, shape index: {}]
  %s1 = inlined_call_operand.vmem [shape: f32[4,32,32], index: 1, kind: input, shape index: {}]
  %s2 = inlined_call_operand.vmem [shape: f32[4,1,32], index: 2, kind: input, shape index: {}]
  %s3 = inlined_call_operand.hbm [shape: f32[4,32,32], index: 3, kind: input, shape index: {}]
  %s4 = inlined_call_operand.vmem [shape: f32[4,1,32], index: 4, kind: input, shape index: {}]
  %s5 = inlined_call_operand.vmem [shape: f32[4,32,1], index: 5, kind: input, shape index: {}]
  %s6 = inlined_call_operand.vmem [shape: f32[4,1,1], index: 6, kind: input, shape index: {}]
  %s7 = inlined_call_operand.vmem [shape: f32[16,4], index: 7, kind: output, shape index: {}]
  %s8 = sld [smem:[#allocation0]]
  $region46: #{tpu_custom_call.1} parent=0
    _
  %s10 = ssub.s32 1, %s8
  %s11 = scalar_select 0, %s10, %s8
  $region1: #{tpu_custom_call.1} parent=0
    #allocation2 [shape = 'u8[8192]{0}', space=vmem, size = 0x2000, scoped, tag = 'input window, operand 0, single buffered']
    #allocation3 [shape = 's32[1]{0}', space=sflag, size = 0x4, scoped, tag = 'scoped memory for tpu_custom_call.1']
    #allocation4 [shape = 'u8[65536]{0}', space=vmem, size = 0x10000, scoped, tag = 'input window, operand 3, single buffered']
    #allocation5 [shape = 's32[1]{0}', space=sflag, size = 0x4, scoped, tag = 'scoped memory for tpu_custom_call.1']
    %12 = vsyncpa [#allocation3], 0
    %13 = vsyncpa [#allocation5], 0
    // Predicated region
    $region2: #{tpu_custom_call.1} parent=1 // pred_check
      _
    $region3: #{tpu_custom_call.1} parent=1 // pred_check_branch
      %15 = sbr.rel (0) target = $region5
    $region4: #{tpu_custom_call.1} parent=1 // pred_region
      %s17 = ssub.s32 256, 256
      %18 = vsyncadd [#allocation3], %s17
      %s19 = sshll.u32 [#allocation2], 4
      %s20 = int_to_ptr.vmem [resolvable:$true] %s19
      %25 = dma.hbm_to_vmem [thread:$0]  %s0, 256, %s20, [#allocation3], 128, 128, 8
    $region5: #{tpu_custom_call.1} parent=1 // pred_fallthru
      _
    // Predicated region
    $region6: #{tpu_custom_call.1} parent=1 // pred_check
      _
    $region7: #{tpu_custom_call.1} parent=1 // pred_check_branch
      %27 = sbr.rel (0) target = $region9
    $region8: #{tpu_custom_call.1} parent=1 // pred_region
      _
    $region9: #{tpu_custom_call.1} parent=1 // pred_fallthru
      _
    // Predicated region
    $region10: #{tpu_custom_call.1} parent=1 // pred_check
      _
    $region11: #{tpu_custom_call.1} parent=1 // pred_check_branch
      %29 = sbr.rel (0) target = $region13
    $region12: #{tpu_custom_call.1} parent=1 // pred_region
      _
    $region13: #{tpu_custom_call.1} parent=1 // pred_fallthru
      _
    // Predicated region
    $region14: #{tpu_custom_call.1} parent=1 // pred_check
      _
    $region15: #{tpu_custom_call.1} parent=1 // pred_check_branch
      %31 = sbr.rel (0) target = $region17
    $region16: #{tpu_custom_call.1} parent=1 // pred_region
      %s33 = ssub.s32 2048, 2048
      %34 = vsyncadd [#allocation5], %s33
      %s35 = sshll.u32 [#allocation4], 4
      %s36 = int_to_ptr.vmem [resolvable:$true] %s35
      %41 = dma.hbm_to_vmem [thread:$0]  %s3, 2048, %s36, [#allocation5], 128, 128, 8
    $region17: #{tpu_custom_call.1} parent=1 // pred_fallthru
      _
    // Predicated region
    $region18: #{tpu_custom_call.1} parent=1 // pred_check
      _
    $region19: #{tpu_custom_call.1} parent=1 // pred_check_branch
      %43 = sbr.rel (0) target = $region21
    $region20: #{tpu_custom_call.1} parent=1 // pred_region
      _
    $region21: #{tpu_custom_call.1} parent=1 // pred_fallthru
      _
    // Predicated region
    $region22: #{tpu_custom_call.1} parent=1 // pred_check
      _
    $region23: #{tpu_custom_call.1} parent=1 // pred_check_branch
      %45 = sbr.rel (0) target = $region25
    $region24: #{tpu_custom_call.1} parent=1 // pred_region
      _
    $region25: #{tpu_custom_call.1} parent=1 // pred_fallthru
      _
    // Predicated region
    $region26: #{tpu_custom_call.1} parent=1 // pred_check
      _
    $region27: #{tpu_custom_call.1} parent=1 // pred_check_branch
      %47 = sbr.rel (0) target = $region29
    $region28: #{tpu_custom_call.1} parent=1 // pred_region
      _
    $region29: #{tpu_custom_call.1} parent=1 // pred_fallthru
      _
    // Predicated region
    $region30: #{tpu_custom_call.1} parent=1 // pred_check
      _
    $region31: #{tpu_custom_call.1} parent=1 // pred_check_branch
      %49 = sbr.rel (0) target = $region33
    $region32: #{tpu_custom_call.1} parent=1 // pred_region
      %50 = dma.done [#allocation3], 256
    $region33: #{tpu_custom_call.1} parent=1 // pred_fallthru
      _
    // Predicated region
    $region34: #{tpu_custom_call.1} parent=1 // pred_check
      _
    $region35: #{tpu_custom_call.1} parent=1 // pred_check_branch
      %52 = sbr.rel (0) target = $region37
    $region36: #{tpu_custom_call.1} parent=1 // pred_region
      %53 = dma.done [#allocation5], 2048
    $region37: #{tpu_custom_call.1} parent=1 // pred_fallthru
      _
    %v54 = vld [vmem:[#allocation2] sm:$0xff]
    %v55 = vld [vmem:[#allocation2 + $0x8] sm:$0xff]
    %v56 = vld [vmem:[%s1] sm:$0xff]
    %v57 = vld [vmem:[%s1 + $0x8] sm:$0xff]
    %v58 = vld [vmem:[%s1 + $0x10] sm:$0xff]
    %v59 = vld [vmem:[%s1 + $0x18] sm:$0xff]
    %v60 = vld [vmem:[%s2] sm:$0x1]
    %v62 = vlaneseq
    %v63 = vshrl.u32 %v62, 7
    %v64 = vsub.s32 0, %v63
    %v65 = vrot.slane %v60, %v64
    %vm67 = vcmask 261120
    %v69 = vsel %vm67, %v54, 0
    %v72 = vsel %vm67, %v55, 0
    %74 = vmatprep.subr.mxu0 0.0
    %75 = vmatpush1.msra.mxu0 0.0
    %76 = vmatprep.subr.mxu0 0.0
    %77 = vmatpush1.msra.mxu0 0.0
    %78 = vmatprep.subr.mxu0 0.0
    %79 = vmatpush1.msra.mxu0 0.0
    %80 = vmatprep.subr.mxu0 0.0
    %81 = vmatpush1.msra.mxu0 0.0
    %82 = vmatprep.subr.mxu0 0.0
    %83 = vmatpush1.msra.mxu0 0.0
    %84 = vmatprep.subr.mxu0 0.0
    %85 = vmatpush1.msra.mxu0 0.0
    %86 = vmatprep.subr.mxu0 0.0
    %87 = vmatpush1.msra.mxu0 0.0
    %88 = vmatprep.subr.mxu0 0.0
    %89 = vmatpush1.msra.mxu0 0.0
    %90 = vmatprep.subr.mxu0 0.0
    %91 = vmatpush1.msra.mxu0 0.0
    %92 = vmatprep.subr.mxu0 0.0
    %93 = vmatpush1.msra.mxu0 0.0
    %94 = vmatprep.subr.mxu0 0.0
    %95 = vmatpush1.msra.mxu0 0.0
    %96 = vmatprep.subr.mxu0 0.0
    %97 = vmatpush1.msra.mxu0 0.0
    %98 = vmatprep.subr.mxu0 0.0
    %99 = vmatpush1.msra.mxu0 %v59
    %100 = vmatprep.subr.mxu0 0.0
    %101 = vmatpush1.msra.mxu0 %v58
    %102 = vmatprep.subr.mxu0 0.0
    %103 = vmatpush1.msra.mxu0 %v57
    %104 = vmatprep.subr.mxu0 0.0
    %105 = vmatpush1.msra.mxu0 %v56
    %106 = vmatprep.subr.mxu0 0.0
    %107 = vmatpush2.msra.mxu0 0.0
    %108 = vmatprep.subr.mxu0 0.0
    %109 = vmatpush2.msra.mxu0 0.0
    %110 = vmatprep.subr.mxu0 0.0
    %111 = vmatpush2.msra.mxu0 0.0
    %112 = vmatprep.subr.mxu0 0.0
    %113 = vmatpush2.msra.mxu0 0.0
    %114 = vmatprep.subr.mxu0 0.0
    %115 = vmatpush2.msra.mxu0 0.0
    %116 = vmatprep.subr.mxu0 0.0
    %117 = vmatpush2.msra.mxu0 0.0
    %118 = vmatprep.subr.mxu0 0.0
    %119 = vmatpush2.msra.mxu0 0.0
    %120 = vmatprep.subr.mxu0 0.0
    %121 = vmatpush2.msra.mxu0 0.0
    %122 = vmatprep.subr.mxu0 0.0
    %123 = vmatpush2.msra.mxu0 0.0
    %124 = vmatprep.subr.mxu0 0.0
    %125 = vmatpush2.msra.mxu0 0.0
    %126 = vmatprep.subr.mxu0 0.0
    %127 = vmatpush2.msra.mxu0 0.0
    %128 = vmatprep.subr.mxu0 0.0
    %129 = vmatpush2.msra.mxu0 0.0
    %130 = vmatprep.subr.mxu0 0.0
    %131 = vmatpush2.msra.mxu0 0.0
    %132 = vmatprep.subr.mxu0 0.0
    %133 = vmatpush2.msra.mxu0 0.0
    %134 = vmatprep.subr.mxu0 0.0
    %135 = vmatpush2.msra.mxu0 0.0
    %136 = vmatprep.subr.mxu0 0.0
    %137 = vmatpush2.msra.mxu0 0.0
    %138 = vmatprep.mubr.f32.mxu0 0.0
    %139 = vmatmul.mubr.f32.gmra.mxu0 %v69
    %v140 = vpop.f32.mrf.mxu0
    %v141 = vadd.f32 %v65, %v140
    %v142 = vpop.f32.mrf.mxu0
    %143 = vmatprep.mubr.f32.mxu0 0.0
    %144 = vmatmul.mubr.f32.gmra.mxu0 %v72
    %v145 = vpop.f32.mrf.mxu0
    %v146 = vadd.f32 %v65, %v145
    %v147 = vpop.f32.mrf.mxu0
    %148 = vdwg.mxu0
    %v149 = vmax.f32 %v141, 0.0
    %v150 = vmax.f32 %v146, 0.0
    %v151 = vand.u32 2147483647, %v141
    %v152 = vand.u32 2147483647, %v146
    %v153 = vsub.f32 0.0, %v151
    %v154 = vsub.f32 0.0, %v152
    %v155 = vmul.f32 %v153, 1.442695
    %v156 = vpow.pop %v155
    %v157 = vmul.f32 %v154, 1.442695
    %v158 = vpow.pop %v157
    %v159 = vadd.f32 %v156, 1.0
    %v160 = vlog2.pop %v159
    %v161 = vmul.f32 %v160, 0.6931472
    %v162 = vmul.f32 -0.5, %v156
    %v163 = vadd.f32 %v162, 1.0
    %v164 = vmul.f32 %v163, %v156
    %v165 = vand.u32 2147483647, %v156
    %vm166 = vcmp.lt.f32.partialorder %v165, 0.0004427343
    %v167 = vsel %vm166, %v164, %v161
    %v168 = vadd.f32 %v158, 1.0
    %v169 = vlog2.pop %v168
    %v170 = vmul.f32 %v169, 0.6931472
    %v171 = vmul.f32 -0.5, %v158
    %v172 = vadd.f32 %v171, 1.0
    %v173 = vmul.f32 %v172, %v158
    %v174 = vand.u32 2147483647, %v158
    %vm175 = vcmp.lt.f32.partialorder %v174, 0.0004427343
    %v176 = vsel %vm175, %v173, %v170
    %v177 = vadd.f32 %v149, %v167
    %v178 = vadd.f32 %v150, %v176
    %v179 = vsub.f32 %v177, 0.6931472
    %v180 = vsub.f32 %v178, 0.6931472
    %v181 = vld [vmem:[#allocation4] sm:$0xff]
    %v182 = vld [vmem:[#allocation4 + $0x8] sm:$0xff]
    %v183 = vld [vmem:[#allocation4 + $0x10] sm:$0xff]
    %v184 = vld [vmem:[#allocation4 + $0x18] sm:$0xff]
    %v185 = vld [vmem:[%s4] sm:$0x1]
    %v187 = vlaneseq
    %v188 = vshrl.u32 %v187, 7
    %v189 = vsub.s32 0, %v188
    %v190 = vrot.slane %v185, %v189
    %v193 = vsel %vm67, %v179, 0
    %v196 = vsel %vm67, %v180, 0
    %198 = vmatprep.subr.mxu0 0.0
    %199 = vmatpush1.msra.mxu0 0.0
    %200 = vmatprep.subr.mxu0 0.0
    %201 = vmatpush1.msra.mxu0 0.0
    %202 = vmatprep.subr.mxu0 0.0
    %203 = vmatpush1.msra.mxu0 0.0
    %204 = vmatprep.subr.mxu0 0.0
    %205 = vmatpush1.msra.mxu0 0.0
    %206 = vmatprep.subr.mxu0 0.0
    %207 = vmatpush1.msra.mxu0 0.0
    %208 = vmatprep.subr.mxu0 0.0
    %209 = vmatpush1.msra.mxu0 0.0
    %210 = vmatprep.subr.mxu0 0.0
    %211 = vmatpush1.msra.mxu0 0.0
    %212 = vmatprep.subr.mxu0 0.0
    %213 = vmatpush1.msra.mxu0 0.0
    %214 = vmatprep.subr.mxu0 0.0
    %215 = vmatpush1.msra.mxu0 0.0
    %216 = vmatprep.subr.mxu0 0.0
    %217 = vmatpush1.msra.mxu0 0.0
    %218 = vmatprep.subr.mxu0 0.0
    %219 = vmatpush1.msra.mxu0 0.0
    %220 = vmatprep.subr.mxu0 0.0
    %221 = vmatpush1.msra.mxu0 0.0
    %222 = vmatprep.subr.mxu0 0.0
    %223 = vmatpush1.msra.mxu0 %v184
    %224 = vmatprep.subr.mxu0 0.0
    %225 = vmatpush1.msra.mxu0 %v183
    %226 = vmatprep.subr.mxu0 0.0
    %227 = vmatpush1.msra.mxu0 %v182
    %228 = vmatprep.subr.mxu0 0.0
    %229 = vmatpush1.msra.mxu0 %v181
    %230 = vmatprep.subr.mxu0 0.0
    %231 = vmatpush2.msra.mxu0 0.0
    %232 = vmatprep.subr.mxu0 0.0
    %233 = vmatpush2.msra.mxu0 0.0
    %234 = vmatprep.subr.mxu0 0.0
    %235 = vmatpush2.msra.mxu0 0.0
    %236 = vmatprep.subr.mxu0 0.0
    %237 = vmatpush2.msra.mxu0 0.0
    %238 = vmatprep.subr.mxu0 0.0
    %239 = vmatpush2.msra.mxu0 0.0
    %240 = vmatprep.subr.mxu0 0.0
    %241 = vmatpush2.msra.mxu0 0.0
    %242 = vmatprep.subr.mxu0 0.0
    %243 = vmatpush2.msra.mxu0 0.0
    %244 = vmatprep.subr.mxu0 0.0
    %245 = vmatpush2.msra.mxu0 0.0
    %246 = vmatprep.subr.mxu0 0.0
    %247 = vmatpush2.msra.mxu0 0.0
    %248 = vmatprep.subr.mxu0 0.0
    %249 = vmatpush2.msra.mxu0 0.0
    %250 = vmatprep.subr.mxu0 0.0
    %251 = vmatpush2.msra.mxu0 0.0
    %252 = vmatprep.subr.mxu0 0.0
    %253 = vmatpush2.msra.mxu0 0.0
    %254 = vmatprep.subr.mxu0 0.0
    %255 = vmatpush2.msra.mxu0 0.0
    %256 = vmatprep.subr.mxu0 0.0
    %257 = vmatpush2.msra.mxu0 0.0
    %258 = vmatprep.subr.mxu0 0.0
    %259 = vmatpush2.msra.mxu0 0.0
    %260 = vmatprep.subr.mxu0 0.0
    %261 = vmatpush2.msra.mxu0 0.0
    %262 = vmatprep.mubr.f32.mxu0 0.0
    %263 = vmatmul.mubr.f32.gmra.mxu0 %v193
    %v264 = vpop.f32.mrf.mxu0
    %v265 = vadd.f32 %v190, %v264
    %v266 = vpop.f32.mrf.mxu0
    %267 = vmatprep.mubr.f32.mxu0 0.0
    %268 = vmatmul.mubr.f32.gmra.mxu0 %v196
    %v269 = vpop.f32.mrf.mxu0
    %v270 = vadd.f32 %v190, %v269
    %v271 = vpop.f32.mrf.mxu0
    %272 = vdwg.mxu0
    %v273 = vmax.f32 %v265, 0.0
    %v274 = vmax.f32 %v270, 0.0
    %v275 = vand.u32 2147483647, %v265
    %v276 = vand.u32 2147483647, %v270
    %v277 = vsub.f32 0.0, %v275
    %v278 = vsub.f32 0.0, %v276
    %v279 = vmul.f32 %v277, 1.442695
    %v280 = vpow.pop %v279
    %v281 = vmul.f32 %v278, 1.442695
    %v282 = vpow.pop %v281
    %v283 = vadd.f32 %v280, 1.0
    %v284 = vlog2.pop %v283
    %v285 = vmul.f32 %v284, 0.6931472
    %v286 = vmul.f32 -0.5, %v280
    %v287 = vadd.f32 %v286, 1.0
    %v288 = vmul.f32 %v287, %v280
    %v289 = vand.u32 2147483647, %v280
    %vm290 = vcmp.lt.f32.partialorder %v289, 0.0004427343
    %v291 = vsel %vm290, %v288, %v285
    %v292 = vadd.f32 %v282, 1.0
    %v293 = vlog2.pop %v292
    %v294 = vmul.f32 %v293, 0.6931472
    %v295 = vmul.f32 -0.5, %v282
    %v296 = vadd.f32 %v295, 1.0
    %v297 = vmul.f32 %v296, %v282
    %v298 = vand.u32 2147483647, %v282
    %vm299 = vcmp.lt.f32.partialorder %v298, 0.0004427343
    %v300 = vsel %vm299, %v297, %v294
    %v301 = vadd.f32 %v273, %v291
    %v302 = vadd.f32 %v274, %v300
    %v303 = vsub.f32 %v301, 0.6931472
    %v304 = vsub.f32 %v302, 0.6931472
    %v305 = vld [vmem:[%s5] sm:$0xff]
    %v306 = vld [vmem:[%s5 + $0x8] sm:$0xff]
    %v307 = vld [vmem:[%s5 + $0x10] sm:$0xff]
    %v308 = vld [vmem:[%s5 + $0x18] sm:$0xff]
    %v309 = vld [vmem:[%s6] sm:$0x1]
    %v311 = vlaneseq
    %v312 = vshrl.u32 %v311, 7
    %v313 = vsub.s32 0, %v312
    %v314 = vrot.slane %v309, %v313
    %v317 = vsel %vm67, %v303, 0
    %v320 = vsel %vm67, %v304, 0
    %322 = vmatprep.subr.mxu0 0.0
    %323 = vmatpush1.msra.mxu0 0.0
    %324 = vmatprep.subr.mxu0 0.0
    %325 = vmatpush1.msra.mxu0 0.0
    %326 = vmatprep.subr.mxu0 0.0
    %327 = vmatpush1.msra.mxu0 0.0
    %328 = vmatprep.subr.mxu0 0.0
    %329 = vmatpush1.msra.mxu0 0.0
    %330 = vmatprep.subr.mxu0 0.0
    %331 = vmatpush1.msra.mxu0 0.0
    %332 = vmatprep.subr.mxu0 0.0
    %333 = vmatpush1.msra.mxu0 0.0
    %334 = vmatprep.subr.mxu0 0.0
    %335 = vmatpush1.msra.mxu0 0.0
    %336 = vmatprep.subr.mxu0 0.0
    %337 = vmatpush1.msra.mxu0 0.0
    %338 = vmatprep.subr.mxu0 0.0
    %339 = vmatpush1.msra.mxu0 0.0
    %340 = vmatprep.subr.mxu0 0.0
    %341 = vmatpush1.msra.mxu0 0.0
    %342 = vmatprep.subr.mxu0 0.0
    %343 = vmatpush1.msra.mxu0 0.0
    %344 = vmatprep.subr.mxu0 0.0
    %345 = vmatpush1.msra.mxu0 0.0
    %346 = vmatprep.subr.mxu0 0.0
    %347 = vmatpush1.msra.mxu0 %v308
    %348 = vmatprep.subr.mxu0 0.0
    %349 = vmatpush1.msra.mxu0 %v307
    %350 = vmatprep.subr.mxu0 0.0
    %351 = vmatpush1.msra.mxu0 %v306
    %352 = vmatprep.subr.mxu0 0.0
    %353 = vmatpush1.msra.mxu0 %v305
    %354 = vmatprep.subr.mxu0 0.0
    %355 = vmatpush2.msra.mxu0 0.0
    %356 = vmatprep.subr.mxu0 0.0
    %357 = vmatpush2.msra.mxu0 0.0
    %358 = vmatprep.subr.mxu0 0.0
    %359 = vmatpush2.msra.mxu0 0.0
    %360 = vmatprep.subr.mxu0 0.0
    %361 = vmatpush2.msra.mxu0 0.0
    %362 = vmatprep.subr.mxu0 0.0
    %363 = vmatpush2.msra.mxu0 0.0
    %364 = vmatprep.subr.mxu0 0.0
    %365 = vmatpush2.msra.mxu0 0.0
    %366 = vmatprep.subr.mxu0 0.0
    %367 = vmatpush2.msra.mxu0 0.0
    %368 = vmatprep.subr.mxu0 0.0
    %369 = vmatpush2.msra.mxu0 0.0
    %370 = vmatprep.subr.mxu0 0.0
    %371 = vmatpush2.msra.mxu0 0.0
    %372 = vmatprep.subr.mxu0 0.0
    %373 = vmatpush2.msra.mxu0 0.0
    %374 = vmatprep.subr.mxu0 0.0
    %375 = vmatpush2.msra.mxu0 0.0
    %376 = vmatprep.subr.mxu0 0.0
    %377 = vmatpush2.msra.mxu0 0.0
    %378 = vmatprep.subr.mxu0 0.0
    %379 = vmatpush2.msra.mxu0 0.0
    %380 = vmatprep.subr.mxu0 0.0
    %381 = vmatpush2.msra.mxu0 0.0
    %382 = vmatprep.subr.mxu0 0.0
    %383 = vmatpush2.msra.mxu0 0.0
    %384 = vmatprep.subr.mxu0 0.0
    %385 = vmatpush2.msra.mxu0 0.0
    %386 = vmatprep.mubr.f32.mxu0 0.0
    %387 = vmatmul.mubr.f32.gmra.mxu0 %v317
    %v388 = vpop.f32.mrf.mxu0
    %v389 = vadd.f32 %v314, %v388
    %v390 = vpop.f32.mrf.mxu0
    %391 = vmatprep.mubr.f32.mxu0 0.0
    %392 = vmatmul.mubr.f32.gmra.mxu0 %v320
    %v393 = vpop.f32.mrf.mxu0
    %v394 = vadd.f32 %v314, %v393
    %v395 = vpop.f32.mrf.mxu0
    %396 = vdwg.mxu0
    %vm397 = vcmask 7168
    %398 = vst.msk [vmem:[%s7] sm:$0xff] %vm397, %v389
    %399 = vst.msk [vmem:[%s7 + $0x8] sm:$0xff] %vm397, %v394
    %s400 = scalar_lea.vmem %s1, 32
    %v401 = vld [vmem:[%s400] sm:$0xff]
    %v402 = vld [vmem:[%s400 + $0x8] sm:$0xff]
    %v403 = vld [vmem:[%s400 + $0x10] sm:$0xff]
    %v404 = vld [vmem:[%s400 + $0x18] sm:$0xff]
    %s405 = scalar_lea.vmem %s2, 1
    %v406 = vld [vmem:[%s405] sm:$0x1]
    %v408 = vlaneseq
    %v409 = vshrl.u32 %v408, 7
    %v410 = vsub.s32 0, %v409
    %v411 = vrot.slane %v406, %v410
    %413 = vmatprep.subr.mxu0 0.0
    %414 = vmatpush1.msra.mxu0 0.0
    %415 = vmatprep.subr.mxu0 0.0
    %416 = vmatpush1.msra.mxu0 0.0
    %417 = vmatprep.subr.mxu0 0.0
    %418 = vmatpush1.msra.mxu0 0.0
    %419 = vmatprep.subr.mxu0 0.0
    %420 = vmatpush1.msra.mxu0 0.0
    %421 = vmatprep.subr.mxu0 0.0
    %422 = vmatpush1.msra.mxu0 0.0
    %423 = vmatprep.subr.mxu0 0.0
    %424 = vmatpush1.msra.mxu0 0.0
    %425 = vmatprep.subr.mxu0 0.0
    %426 = vmatpush1.msra.mxu0 0.0
    %427 = vmatprep.subr.mxu0 0.0
    %428 = vmatpush1.msra.mxu0 0.0
    %429 = vmatprep.subr.mxu0 0.0
    %430 = vmatpush1.msra.mxu0 0.0
    %431 = vmatprep.subr.mxu0 0.0
    %432 = vmatpush1.msra.mxu0 0.0
    %433 = vmatprep.subr.mxu0 0.0
    %434 = vmatpush1.msra.mxu0 0.0
    %435 = vmatprep.subr.mxu0 0.0
    %436 = vmatpush1.msra.mxu0 0.0
    %437 = vmatprep.subr.mxu0 0.0
    %438 = vmatpush1.msra.mxu0 %v404
    %439 = vmatprep.subr.mxu0 0.0
    %440 = vmatpush1.msra.mxu0 %v403
    %441 = vmatprep.subr.mxu0 0.0
    %442 = vmatpush1.msra.mxu0 %v402
    %443 = vmatprep.subr.mxu0 0.0
    %444 = vmatpush1.msra.mxu0 %v401
    %445 = vmatprep.subr.mxu0 0.0
    %446 = vmatpush2.msra.mxu0 0.0
    %447 = vmatprep.subr.mxu0 0.0
    %448 = vmatpush2.msra.mxu0 0.0
    %449 = vmatprep.subr.mxu0 0.0
    %450 = vmatpush2.msra.mxu0 0.0
    %451 = vmatprep.subr.mxu0 0.0
    %452 = vmatpush2.msra.mxu0 0.0
    %453 = vmatprep.subr.mxu0 0.0
    %454 = vmatpush2.msra.mxu0 0.0
    %455 = vmatprep.subr.mxu0 0.0
    %456 = vmatpush2.msra.mxu0 0.0
    %457 = vmatprep.subr.mxu0 0.0
    %458 = vmatpush2.msra.mxu0 0.0
    %459 = vmatprep.subr.mxu0 0.0
    %460 = vmatpush2.msra.mxu0 0.0
    %461 = vmatprep.subr.mxu0 0.0
    %462 = vmatpush2.msra.mxu0 0.0
    %463 = vmatprep.subr.mxu0 0.0
    %464 = vmatpush2.msra.mxu0 0.0
    %465 = vmatprep.subr.mxu0 0.0
    %466 = vmatpush2.msra.mxu0 0.0
    %467 = vmatprep.subr.mxu0 0.0
    %468 = vmatpush2.msra.mxu0 0.0
    %469 = vmatprep.subr.mxu0 0.0
    %470 = vmatpush2.msra.mxu0 0.0
    %471 = vmatprep.subr.mxu0 0.0
    %472 = vmatpush2.msra.mxu0 0.0
    %473 = vmatprep.subr.mxu0 0.0
    %474 = vmatpush2.msra.mxu0 0.0
    %475 = vmatprep.subr.mxu0 0.0
    %476 = vmatpush2.msra.mxu0 0.0
    %477 = vmatprep.mubr.f32.mxu0 0.0
    %478 = vmatmul.mubr.f32.gmra.mxu0 %v69
    %v479 = vpop.f32.mrf.mxu0
    %v480 = vadd.f32 %v411, %v479
    %v481 = vpop.f32.mrf.mxu0
    %482 = vmatprep.mubr.f32.mxu0 0.0
    %483 = vmatmul.mubr.f32.gmra.mxu0 %v72
    %v484 = vpop.f32.mrf.mxu0
    %v485 = vadd.f32 %v411, %v484
    %v486 = vpop.f32.mrf.mxu0
    %487 = vdwg.mxu0
    %v488 = vmax.f32 %v480, 0.0
    %v489 = vmax.f32 %v485, 0.0
    %v490 = vand.u32 2147483647, %v480
    %v491 = vand.u32 2147483647, %v485
    %v492 = vsub.f32 0.0, %v490
    %v493 = vsub.f32 0.0, %v491
    %v494 = vmul.f32 %v492, 1.442695
    %v495 = vpow.pop %v494
    %v496 = vmul.f32 %v493, 1.442695
    %v497 = vpow.pop %v496
    %v498 = vadd.f32 %v495, 1.0
    %v499 = vlog2.pop %v498
    %v500 = vmul.f32 %v499, 0.6931472
    %v501 = vmul.f32 -0.5, %v495
    %v502 = vadd.f32 %v501, 1.0
    %v503 = vmul.f32 %v502, %v495
    %v504 = vand.u32 2147483647, %v495
    %vm505 = vcmp.lt.f32.partialorder %v504, 0.0004427343
    %v506 = vsel %vm505, %v503, %v500
    %v507 = vadd.f32 %v497, 1.0
    %v508 = vlog2.pop %v507
    %v509 = vmul.f32 %v508, 0.6931472
    %v510 = vmul.f32 -0.5, %v497
    %v511 = vadd.f32 %v510, 1.0
    %v512 = vmul.f32 %v511, %v497
    %v513 = vand.u32 2147483647, %v497
    %vm514 = vcmp.lt.f32.partialorder %v513, 0.0004427343
    %v515 = vsel %vm514, %v512, %v509
    %v516 = vadd.f32 %v488, %v506
    %v517 = vadd.f32 %v489, %v515
    %v518 = vsub.f32 %v516, 0.6931472
    %v519 = vsub.f32 %v517, 0.6931472
    %s520 = scalar_lea.vmem [#allocation4], 32
    %v521 = vld [vmem:[%s520] sm:$0xff]
    %v522 = vld [vmem:[%s520 + $0x8] sm:$0xff]
    %v523 = vld [vmem:[%s520 + $0x10] sm:$0xff]
    %v524 = vld [vmem:[%s520 + $0x18] sm:$0xff]
    %s525 = scalar_lea.vmem %s4, 1
    %v526 = vld [vmem:[%s525] sm:$0x1]
    %v528 = vlaneseq
    %v529 = vshrl.u32 %v528, 7
    %v530 = vsub.s32 0, %v529
    %v531 = vrot.slane %v526, %v530
    %v534 = vsel %vm67, %v518, 0
    %v537 = vsel %vm67, %v519, 0
    %539 = vmatprep.subr.mxu0 0.0
    %540 = vmatpush1.msra.mxu0 0.0
    %541 = vmatprep.subr.mxu0 0.0
    %542 = vmatpush1.msra.mxu0 0.0
    %543 = vmatprep.subr.mxu0 0.0
    %544 = vmatpush1.msra.mxu0 0.0
    %545 = vmatprep.subr.mxu0 0.0
    %546 = vmatpush1.msra.mxu0 0.0
    %547 = vmatprep.subr.mxu0 0.0
    %548 = vmatpush1.msra.mxu0 0.0
    %549 = vmatprep.subr.mxu0 0.0
    %550 = vmatpush1.msra.mxu0 0.0
    %551 = vmatprep.subr.mxu0 0.0
    %552 = vmatpush1.msra.mxu0 0.0
    %553 = vmatprep.subr.mxu0 0.0
    %554 = vmatpush1.msra.mxu0 0.0
    %555 = vmatprep.subr.mxu0 0.0
    %556 = vmatpush1.msra.mxu0 0.0
    %557 = vmatprep.subr.mxu0 0.0
    %558 = vmatpush1.msra.mxu0 0.0
    %559 = vmatprep.subr.mxu0 0.0
    %560 = vmatpush1.msra.mxu0 0.0
    %561 = vmatprep.subr.mxu0 0.0
    %562 = vmatpush1.msra.mxu0 0.0
    %563 = vmatprep.subr.mxu0 0.0
    %564 = vmatpush1.msra.mxu0 %v524
    %565 = vmatprep.subr.mxu0 0.0
    %566 = vmatpush1.msra.mxu0 %v523
    %567 = vmatprep.subr.mxu0 0.0
    %568 = vmatpush1.msra.mxu0 %v522
    %569 = vmatprep.subr.mxu0 0.0
    %570 = vmatpush1.msra.mxu0 %v521
    %571 = vmatprep.subr.mxu0 0.0
    %572 = vmatpush2.msra.mxu0 0.0
    %573 = vmatprep.subr.mxu0 0.0
    %574 = vmatpush2.msra.mxu0 0.0
    %575 = vmatprep.subr.mxu0 0.0
    %576 = vmatpush2.msra.mxu0 0.0
    %577 = vmatprep.subr.mxu0 0.0
    %578 = vmatpush2.msra.mxu0 0.0
    %579 = vmatprep.subr.mxu0 0.0
    %580 = vmatpush2.msra.mxu0 0.0
    %581 = vmatprep.subr.mxu0 0.0
    %582 = vmatpush2.msra.mxu0 0.0
    %583 = vmatprep.subr.mxu0 0.0
    %584 = vmatpush2.msra.mxu0 0.0
    %585 = vmatprep.subr.mxu0 0.0
    %586 = vmatpush2.msra.mxu0 0.0
    %587 = vmatprep.subr.mxu0 0.0
    %588 = vmatpush2.msra.mxu0 0.0
    %589 = vmatprep.subr.mxu0 0.0
    %590 = vmatpush2.msra.mxu0 0.0
    %591 = vmatprep.subr.mxu0 0.0
    %592 = vmatpush2.msra.mxu0 0.0
    %593 = vmatprep.subr.mxu0 0.0
    %594 = vmatpush2.msra.mxu0 0.0
    %595 = vmatprep.subr.mxu0 0.0
    %596 = vmatpush2.msra.mxu0 0.0
    %597 = vmatprep.subr.mxu0 0.0
    %598 = vmatpush2.msra.mxu0 0.0
    %599 = vmatprep.subr.mxu0 0.0
    %600 = vmatpush2.msra.mxu0 0.0
    %601 = vmatprep.subr.mxu0 0.0
    %602 = vmatpush2.msra.mxu0 0.0
    %603 = vmatprep.mubr.f32.mxu0 0.0
    %604 = vmatmul.mubr.f32.gmra.mxu0 %v534
    %v605 = vpop.f32.mrf.mxu0
    %v606 = vadd.f32 %v531, %v605
    %v607 = vpop.f32.mrf.mxu0
    %608 = vmatprep.mubr.f32.mxu0 0.0
    %609 = vmatmul.mubr.f32.gmra.mxu0 %v537
    %v610 = vpop.f32.mrf.mxu0
    %v611 = vadd.f32 %v531, %v610
    %v612 = vpop.f32.mrf.mxu0
    %613 = vdwg.mxu0
    %v614 = vmax.f32 %v606, 0.0
    %v615 = vmax.f32 %v611, 0.0
    %v616 = vand.u32 2147483647, %v606
    %v617 = vand.u32 2147483647, %v611
    %v618 = vsub.f32 0.0, %v616
    %v619 = vsub.f32 0.0, %v617
    %v620 = vmul.f32 %v618, 1.442695
    %v621 = vpow.pop %v620
    %v622 = vmul.f32 %v619, 1.442695
    %v623 = vpow.pop %v622
    %v624 = vadd.f32 %v621, 1.0
    %v625 = vlog2.pop %v624
    %v626 = vmul.f32 %v625, 0.6931472
    %v627 = vmul.f32 -0.5, %v621
    %v628 = vadd.f32 %v627, 1.0
    %v629 = vmul.f32 %v628, %v621
    %v630 = vand.u32 2147483647, %v621
    %vm631 = vcmp.lt.f32.partialorder %v630, 0.0004427343
    %v632 = vsel %vm631, %v629, %v626
    %v633 = vadd.f32 %v623, 1.0
    %v634 = vlog2.pop %v633
    %v635 = vmul.f32 %v634, 0.6931472
    %v636 = vmul.f32 -0.5, %v623
    %v637 = vadd.f32 %v636, 1.0
    %v638 = vmul.f32 %v637, %v623
    %v639 = vand.u32 2147483647, %v623
    %vm640 = vcmp.lt.f32.partialorder %v639, 0.0004427343
    %v641 = vsel %vm640, %v638, %v635
    %v642 = vadd.f32 %v614, %v632
    %v643 = vadd.f32 %v615, %v641
    %v644 = vsub.f32 %v642, 0.6931472
    %v645 = vsub.f32 %v643, 0.6931472
    %s646 = scalar_lea.vmem %s5, 32
    %v647 = vld [vmem:[%s646] sm:$0xff]
    %v648 = vld [vmem:[%s646 + $0x8] sm:$0xff]
    %v649 = vld [vmem:[%s646 + $0x10] sm:$0xff]
    %v650 = vld [vmem:[%s646 + $0x18] sm:$0xff]
    %s651 = scalar_lea.vmem %s6, 1
    %v652 = vld [vmem:[%s651] sm:$0x1]
    %v654 = vlaneseq
    %v655 = vshrl.u32 %v654, 7
    %v656 = vsub.s32 0, %v655
    %v657 = vrot.slane %v652, %v656
    %v660 = vsel %vm67, %v644, 0
    %v663 = vsel %vm67, %v645, 0
    %665 = vmatprep.subr.mxu0 0.0
    %666 = vmatpush1.msra.mxu0 0.0
    %667 = vmatprep.subr.mxu0 0.0
    %668 = vmatpush1.msra.mxu0 0.0
    %669 = vmatprep.subr.mxu0 0.0
    %670 = vmatpush1.msra.mxu0 0.0
    %671 = vmatprep.subr.mxu0 0.0
    %672 = vmatpush1.msra.mxu0 0.0
    %673 = vmatprep.subr.mxu0 0.0
    %674 = vmatpush1.msra.mxu0 0.0
    %675 = vmatprep.subr.mxu0 0.0
    %676 = vmatpush1.msra.mxu0 0.0
    %677 = vmatprep.subr.mxu0 0.0
    %678 = vmatpush1.msra.mxu0 0.0
    %679 = vmatprep.subr.mxu0 0.0
    %680 = vmatpush1.msra.mxu0 0.0
    %681 = vmatprep.subr.mxu0 0.0
    %682 = vmatpush1.msra.mxu0 0.0
    %683 = vmatprep.subr.mxu0 0.0
    %684 = vmatpush1.msra.mxu0 0.0
    %685 = vmatprep.subr.mxu0 0.0
    %686 = vmatpush1.msra.mxu0 0.0
    %687 = vmatprep.subr.mxu0 0.0
    %688 = vmatpush1.msra.mxu0 0.0
    %689 = vmatprep.subr.mxu0 0.0
    %690 = vmatpush1.msra.mxu0 %v650
    %691 = vmatprep.subr.mxu0 0.0
    %692 = vmatpush1.msra.mxu0 %v649
    %693 = vmatprep.subr.mxu0 0.0
    %694 = vmatpush1.msra.mxu0 %v648
    %695 = vmatprep.subr.mxu0 0.0
    %696 = vmatpush1.msra.mxu0 %v647
    %697 = vmatprep.subr.mxu0 0.0
    %698 = vmatpush2.msra.mxu0 0.0
    %699 = vmatprep.subr.mxu0 0.0
    %700 = vmatpush2.msra.mxu0 0.0
    %701 = vmatprep.subr.mxu0 0.0
    %702 = vmatpush2.msra.mxu0 0.0
    %703 = vmatprep.subr.mxu0 0.0
    %704 = vmatpush2.msra.mxu0 0.0
    %705 = vmatprep.subr.mxu0 0.0
    %706 = vmatpush2.msra.mxu0 0.0
    %707 = vmatprep.subr.mxu0 0.0
    %708 = vmatpush2.msra.mxu0 0.0
    %709 = vmatprep.subr.mxu0 0.0
    %710 = vmatpush2.msra.mxu0 0.0
    %711 = vmatprep.subr.mxu0 0.0
    %712 = vmatpush2.msra.mxu0 0.0
    %713 = vmatprep.subr.mxu0 0.0
    %714 = vmatpush2.msra.mxu0 0.0
    %715 = vmatprep.subr.mxu0 0.0
    %716 = vmatpush2.msra.mxu0 0.0
    %717 = vmatprep.subr.mxu0 0.0
    %718 = vmatpush2.msra.mxu0 0.0
    %719 = vmatprep.subr.mxu0 0.0
    %720 = vmatpush2.msra.mxu0 0.0
    %721 = vmatprep.subr.mxu0 0.0
    %722 = vmatpush2.msra.mxu0 0.0
    %723 = vmatprep.subr.mxu0 0.0
    %724 = vmatpush2.msra.mxu0 0.0
    %725 = vmatprep.subr.mxu0 0.0
    %726 = vmatpush2.msra.mxu0 0.0
    %727 = vmatprep.subr.mxu0 0.0
    %728 = vmatpush2.msra.mxu0 0.0
    %729 = vmatprep.mubr.f32.mxu0 0.0
    %730 = vmatmul.mubr.f32.gmra.mxu0 %v660
    %v731 = vpop.f32.mrf.mxu0
    %v732 = vadd.f32 %v657, %v731
    %v733 = vpop.f32.mrf.mxu0
    %734 = vmatprep.mubr.f32.mxu0 0.0
    %735 = vmatmul.mubr.f32.gmra.mxu0 %v663
    %v736 = vpop.f32.mrf.mxu0
    %v737 = vadd.f32 %v657, %v736
    %v738 = vpop.f32.mrf.mxu0
    %739 = vdwg.mxu0
    %742 = vrot.lane.b32.xlu0 %v732, 1
    %v743 = vpop.permute.xlu0 %742
    %744 = vrot.lane.b32.xlu0 %v737, 1
    %v745 = vpop.permute.xlu0 %744
    %vm748 = vcmask 15368
    %749 = vst.msk [vmem:[%s7] sm:$0xff] %vm748, %v743
    %750 = vst.msk [vmem:[%s7 + $0x8] sm:$0xff] %vm748, %v745
    %s751 = scalar_lea.vmem %s1, 64
    %v752 = vld [vmem:[%s751] sm:$0xff]
    %v753 = vld [vmem:[%s751 + $0x8] sm:$0xff]
    %v754 = vld [vmem:[%s751 + $0x10] sm:$0xff]
    %v755 = vld [vmem:[%s751 + $0x18] sm:$0xff]
    %s756 = scalar_lea.vmem %s2, 2
    %v757 = vld [vmem:[%s756] sm:$0x1]
    %v759 = vlaneseq
    %v760 = vshrl.u32 %v759, 7
    %v761 = vsub.s32 0, %v760
    %v762 = vrot.slane %v757, %v761
    %764 = vmatprep.subr.mxu0 0.0
    %765 = vmatpush1.msra.mxu0 0.0
    %766 = vmatprep.subr.mxu0 0.0
    %767 = vmatpush1.msra.mxu0 0.0
    %768 = vmatprep.subr.mxu0 0.0
    %769 = vmatpush1.msra.mxu0 0.0
    %770 = vmatprep.subr.mxu0 0.0
    %771 = vmatpush1.msra.mxu0 0.0
    %772 = vmatprep.subr.mxu0 0.0
    %773 = vmatpush1.msra.mxu0 0.0
    %774 = vmatprep.subr.mxu0 0.0
    %775 = vmatpush1.msra.mxu0 0.0
    %776 = vmatprep.subr.mxu0 0.0
    %777 = vmatpush1.msra.mxu0 0.0
    %778 = vmatprep.subr.mxu0 0.0
    %779 = vmatpush1.msra.mxu0 0.0
    %780 = vmatprep.subr.mxu0 0.0
    %781 = vmatpush1.msra.mxu0 0.0
    %782 = vmatprep.subr.mxu0 0.0
    %783 = vmatpush1.msra.mxu0 0.0
    %784 = vmatprep.subr.mxu0 0.0
    %785 = vmatpush1.msra.mxu0 0.0
    %786 = vmatprep.subr.mxu0 0.0
    %787 = vmatpush1.msra.mxu0 0.0
    %788 = vmatprep.subr.mxu0 0.0
    %789 = vmatpush1.msra.mxu0 %v755
    %790 = vmatprep.subr.mxu0 0.0
    %791 = vmatpush1.msra.mxu0 %v754
    %792 = vmatprep.subr.mxu0 0.0
    %793 = vmatpush1.msra.mxu0 %v753
    %794 = vmatprep.subr.mxu0 0.0
    %795 = vmatpush1.msra.mxu0 %v752
    %796 = vmatprep.subr.mxu0 0.0
    %797 = vmatpush2.msra.mxu0 0.0
    %798 = vmatprep.subr.mxu0 0.0
    %799 = vmatpush2.msra.mxu0 0.0
    %800 = vmatprep.subr.mxu0 0.0
    %801 = vmatpush2.msra.mxu0 0.0
    %802 = vmatprep.subr.mxu0 0.0
    %803 = vmatpush2.msra.mxu0 0.0
    %804 = vmatprep.subr.mxu0 0.0
    %805 = vmatpush2.msra.mxu0 0.0
    %806 = vmatprep.subr.mxu0 0.0
    %807 = vmatpush2.msra.mxu0 0.0
    %808 = vmatprep.subr.mxu0 0.0
    %809 = vmatpush2.msra.mxu0 0.0
    %810 = vmatprep.subr.mxu0 0.0
    %811 = vmatpush2.msra.mxu0 0.0
    %812 = vmatprep.subr.mxu0 0.0
    %813 = vmatpush2.msra.mxu0 0.0
    %814 = vmatprep.subr.mxu0 0.0
    %815 = vmatpush2.msra.mxu0 0.0
    %816 = vmatprep.subr.mxu0 0.0
    %817 = vmatpush2.msra.mxu0 0.0
    %818 = vmatprep.subr.mxu0 0.0
    %819 = vmatpush2.msra.mxu0 0.0
    %820 = vmatprep.subr.mxu0 0.0
    %821 = vmatpush2.msra.mxu0 0.0
    %822 = vmatprep.subr.mxu0 0.0
    %823 = vmatpush2.msra.mxu0 0.0
    %824 = vmatprep.subr.mxu0 0.0
    %825 = vmatpush2.msra.mxu0 0.0
    %826 = vmatprep.subr.mxu0 0.0
    %827 = vmatpush2.msra.mxu0 0.0
    %828 = vmatprep.mubr.f32.mxu0 0.0
    %829 = vmatmul.mubr.f32.gmra.mxu0 %v69
    %v830 = vpop.f32.mrf.mxu0
    %v831 = vadd.f32 %v762, %v830
    %v832 = vpop.f32.mrf.mxu0
    %833 = vmatprep.mubr.f32.mxu0 0.0
    %834 = vmatmul.mubr.f32.gmra.mxu0 %v72
    %v835 = vpop.f32.mrf.mxu0
    %v836 = vadd.f32 %v762, %v835
    %v837 = vpop.f32.mrf.mxu0
    %838 = vdwg.mxu0
    %v839 = vmax.f32 %v831, 0.0
    %v840 = vmax.f32 %v836, 0.0
    %v841 = vand.u32 2147483647, %v831
    %v842 = vand.u32 2147483647, %v836
    %v843 = vsub.f32 0.0, %v841
    %v844 = vsub.f32 0.0, %v842
    %v845 = vmul.f32 %v843, 1.442695
    %v846 = vpow.pop %v845
    %v847 = vmul.f32 %v844, 1.442695
    %v848 = vpow.pop %v847
    %v849 = vadd.f32 %v846, 1.0
    %v850 = vlog2.pop %v849
    %v851 = vmul.f32 %v850, 0.6931472
    %v852 = vmul.f32 -0.5, %v846
    %v853 = vadd.f32 %v852, 1.0
    %v854 = vmul.f32 %v853, %v846
    %v855 = vand.u32 2147483647, %v846
    %vm856 = vcmp.lt.f32.partialorder %v855, 0.0004427343
    %v857 = vsel %vm856, %v854, %v851
    %v858 = vadd.f32 %v848, 1.0
    %v859 = vlog2.pop %v858
    %v860 = vmul.f32 %v859, 0.6931472
    %v861 = vmul.f32 -0.5, %v848
    %v862 = vadd.f32 %v861, 1.0
    %v863 = vmul.f32 %v862, %v848
    %v864 = vand.u32 2147483647, %v848
    %vm865 = vcmp.lt.f32.partialorder %v864, 0.0004427343
    %v866 = vsel %vm865, %v863, %v860
    %v867 = vadd.f32 %v839, %v857
    %v868 = vadd.f32 %v840, %v866
    %v869 = vsub.f32 %v867, 0.6931472
    %v870 = vsub.f32 %v868, 0.6931472
    %s871 = scalar_lea.vmem [#allocation4], 64
    %v872 = vld [vmem:[%s871] sm:$0xff]
    %v873 = vld [vmem:[%s871 + $0x8] sm:$0xff]
    %v874 = vld [vmem:[%s871 + $0x10] sm:$0xff]
    %v875 = vld [vmem:[%s871 + $0x18] sm:$0xff]
    %s876 = scalar_lea.vmem %s4, 2
    %v877 = vld [vmem:[%s876] sm:$0x1]
    %v879 = vlaneseq
    %v880 = vshrl.u32 %v879, 7
    %v881 = vsub.s32 0, %v880
    %v882 = vrot.slane %v877, %v881
    %v885 = vsel %vm67, %v869, 0
    %v888 = vsel %vm67, %v870, 0
    %890 = vmatprep.subr.mxu0 0.0
    %891 = vmatpush1.msra.mxu0 0.0
    %892 = vmatprep.subr.mxu0 0.0
    %893 = vmatpush1.msra.mxu0 0.0
    %894 = vmatprep.subr.mxu0 0.0
    %895 = vmatpush1.msra.mxu0 0.0
    %896 = vmatprep.subr.mxu0 0.0
    %897 = vmatpush1.msra.mxu0 0.0
    %898 = vmatprep.subr.mxu0 0.0
    %899 = vmatpush1.msra.mxu0 0.0
    %900 = vmatprep.subr.mxu0 0.0
    %901 = vmatpush1.msra.mxu0 0.0
    %902 = vmatprep.subr.mxu0 0.0
    %903 = vmatpush1.msra.mxu0 0.0
    %904 = vmatprep.subr.mxu0 0.0
    %905 = vmatpush1.msra.mxu0 0.0
    %906 = vmatprep.subr.mxu0 0.0
    %907 = vmatpush1.msra.mxu0 0.0
    %908 = vmatprep.subr.mxu0 0.0
    %909 = vmatpush1.msra.mxu0 0.0
    %910 = vmatprep.subr.mxu0 0.0
    %911 = vmatpush1.msra.mxu0 0.0
    %912 = vmatprep.subr.mxu0 0.0
    %913 = vmatpush1.msra.mxu0 0.0
    %914 = vmatprep.subr.mxu0 0.0
    %915 = vmatpush1.msra.mxu0 %v875
    %916 = vmatprep.subr.mxu0 0.0
    %917 = vmatpush1.msra.mxu0 %v874
    %918 = vmatprep.subr.mxu0 0.0
    %919 = vmatpush1.msra.mxu0 %v873
    %920 = vmatprep.subr.mxu0 0.0
    %921 = vmatpush1.msra.mxu0 %v872
    %922 = vmatprep.subr.mxu0 0.0
    %923 = vmatpush2.msra.mxu0 0.0
    %924 = vmatprep.subr.mxu0 0.0
    %925 = vmatpush2.msra.mxu0 0.0
    %926 = vmatprep.subr.mxu0 0.0
    %927 = vmatpush2.msra.mxu0 0.0
    %928 = vmatprep.subr.mxu0 0.0
    %929 = vmatpush2.msra.mxu0 0.0
    %930 = vmatprep.subr.mxu0 0.0
    %931 = vmatpush2.msra.mxu0 0.0
    %932 = vmatprep.subr.mxu0 0.0
    %933 = vmatpush2.msra.mxu0 0.0
    %934 = vmatprep.subr.mxu0 0.0
    %935 = vmatpush2.msra.mxu0 0.0
    %936 = vmatprep.subr.mxu0 0.0
    %937 = vmatpush2.msra.mxu0 0.0
    %938 = vmatprep.subr.mxu0 0.0
    %939 = vmatpush2.msra.mxu0 0.0
    %940 = vmatprep.subr.mxu0 0.0
    %941 = vmatpush2.msra.mxu0 0.0
    %942 = vmatprep.subr.mxu0 0.0
    %943 = vmatpush2.msra.mxu0 0.0
    %944 = vmatprep.subr.mxu0 0.0
    %945 = vmatpush2.msra.mxu0 0.0
    %946 = vmatprep.subr.mxu0 0.0
    %947 = vmatpush2.msra.mxu0 0.0
    %948 = vmatprep.subr.mxu0 0.0
    %949 = vmatpush2.msra.mxu0 0.0
    %950 = vmatprep.subr.mxu0 0.0
    %951 = vmatpush2.msra.mxu0 0.0
    %952 = vmatprep.subr.mxu0 0.0
    %953 = vmatpush2.msra.mxu0 0.0
    %954 = vmatprep.mubr.f32.mxu0 0.0
    %955 = vmatmul.mubr.f32.gmra.mxu0 %v885
    %v956 = vpop.f32.mrf.mxu0
    %v957 = vadd.f32 %v882, %v956
    %v958 = vpop.f32.mrf.mxu0
    %959 = vmatprep.mubr.f32.mxu0 0.0
    %960 = vmatmul.mubr.f32.gmra.mxu0 %v888
    %v961 = vpop.f32.mrf.mxu0
    %v962 = vadd.f32 %v882, %v961
    %v963 = vpop.f32.mrf.mxu0
    %964 = vdwg.mxu0
    %v965 = vmax.f32 %v957, 0.0
    %v966 = vmax.f32 %v962, 0.0
    %v967 = vand.u32 2147483647, %v957
    %v968 = vand.u32 2147483647, %v962
    %v969 = vsub.f32 0.0, %v967
    %v970 = vsub.f32 0.0, %v968
    %v971 = vmul.f32 %v969, 1.442695
    %v972 = vpow.pop %v971
    %v973 = vmul.f32 %v970, 1.442695
    %v974 = vpow.pop %v973
    %v975 = vadd.f32 %v972, 1.0
    %v976 = vlog2.pop %v975
    %v977 = vmul.f32 %v976, 0.6931472
    %v978 = vmul.f32 -0.5, %v972
    %v979 = vadd.f32 %v978, 1.0
    %v980 = vmul.f32 %v979, %v972
    %v981 = vand.u32 2147483647, %v972
    %vm982 = vcmp.lt.f32.partialorder %v981, 0.0004427343
    %v983 = vsel %vm982, %v980, %v977
    %v984 = vadd.f32 %v974, 1.0
    %v985 = vlog2.pop %v984
    %v986 = vmul.f32 %v985, 0.6931472
    %v987 = vmul.f32 -0.5, %v974
    %v988 = vadd.f32 %v987, 1.0
    %v989 = vmul.f32 %v988, %v974
    %v990 = vand.u32 2147483647, %v974
    %vm991 = vcmp.lt.f32.partialorder %v990, 0.0004427343
    %v992 = vsel %vm991, %v989, %v986
    %v993 = vadd.f32 %v965, %v983
    %v994 = vadd.f32 %v966, %v992
    %v995 = vsub.f32 %v993, 0.6931472
    %v996 = vsub.f32 %v994, 0.6931472
    %s997 = scalar_lea.vmem %s5, 64
    %v998 = vld [vmem:[%s997] sm:$0xff]
    %v999 = vld [vmem:[%s997 + $0x8] sm:$0xff]
    %v1000 = vld [vmem:[%s997 + $0x10] sm:$0xff]
    %v1001 = vld [vmem:[%s997 + $0x18] sm:$0xff]
    %s1002 = scalar_lea.vmem %s6, 2
    %v1003 = vld [vmem:[%s1002] sm:$0x1]
    %v1005 = vlaneseq
    %v1006 = vshrl.u32 %v1005, 7
    %v1007 = vsub.s32 0, %v1006
    %v1008 = vrot.slane %v1003, %v1007
    %v1011 = vsel %vm67, %v995, 0
    %v1014 = vsel %vm67, %v996, 0
    %1016 = vmatprep.subr.mxu0 0.0
    %1017 = vmatpush1.msra.mxu0 0.0
    %1018 = vmatprep.subr.mxu0 0.0
    %1019 = vmatpush1.msra.mxu0 0.0
    %1020 = vmatprep.subr.mxu0 0.0
    %1021 = vmatpush1.msra.mxu0 0.0
    %1022 = vmatprep.subr.mxu0 0.0
    %1023 = vmatpush1.msra.mxu0 0.0
    %1024 = vmatprep.subr.mxu0 0.0
    %1025 = vmatpush1.msra.mxu0 0.0
    %1026 = vmatprep.subr.mxu0 0.0
    %1027 = vmatpush1.msra.mxu0 0.0
    %1028 = vmatprep.subr.mxu0 0.0
    %1029 = vmatpush1.msra.mxu0 0.0
    %1030 = vmatprep.subr.mxu0 0.0
    %1031 = vmatpush1.msra.mxu0 0.0
    %1032 = vmatprep.subr.mxu0 0.0
    %1033 = vmatpush1.msra.mxu0 0.0
    %1034 = vmatprep.subr.mxu0 0.0
    %1035 = vmatpush1.msra.mxu0 0.0
    %1036 = vmatprep.subr.mxu0 0.0
    %1037 = vmatpush1.msra.mxu0 0.0
    %1038 = vmatprep.subr.mxu0 0.0
    %1039 = vmatpush1.msra.mxu0 0.0
    %1040 = vmatprep.subr.mxu0 0.0
    %1041 = vmatpush1.msra.mxu0 %v1001
    %1042 = vmatprep.subr.mxu0 0.0
    %1043 = vmatpush1.msra.mxu0 %v1000
    %1044 = vmatprep.subr.mxu0 0.0
    %1045 = vmatpush1.msra.mxu0 %v999
    %1046 = vmatprep.subr.mxu0 0.0
    %1047 = vmatpush1.msra.mxu0 %v998
    %1048 = vmatprep.subr.mxu0 0.0
    %1049 = vmatpush2.msra.mxu0 0.0
    %1050 = vmatprep.subr.mxu0 0.0
    %1051 = vmatpush2.msra.mxu0 0.0
    %1052 = vmatprep.subr.mxu0 0.0
    %1053 = vmatpush2.msra.mxu0 0.0
    %1054 = vmatprep.subr.mxu0 0.0
    %1055 = vmatpush2.msra.mxu0 0.0
    %1056 = vmatprep.subr.mxu0 0.0
    %1057 = vmatpush2.msra.mxu0 0.0
    %1058 = vmatprep.subr.mxu0 0.0
    %1059 = vmatpush2.msra.mxu0 0.0
    %1060 = vmatprep.subr.mxu0 0.0
    %1061 = vmatpush2.msra.mxu0 0.0
    %1062 = vmatprep.subr.mxu0 0.0
    %1063 = vmatpush2.msra.mxu0 0.0
    %1064 = vmatprep.subr.mxu0 0.0
    %1065 = vmatpush2.msra.mxu0 0.0
    %1066 = vmatprep.subr.mxu0 0.0
    %1067 = vmatpush2.msra.mxu0 0.0
    %1068 = vmatprep.subr.mxu0 0.0
    %1069 = vmatpush2.msra.mxu0 0.0
    %1070 = vmatprep.subr.mxu0 0.0
    %1071 = vmatpush2.msra.mxu0 0.0
    %1072 = vmatprep.subr.mxu0 0.0
    %1073 = vmatpush2.msra.mxu0 0.0
    %1074 = vmatprep.subr.mxu0 0.0
    %1075 = vmatpush2.msra.mxu0 0.0
    %1076 = vmatprep.subr.mxu0 0.0
    %1077 = vmatpush2.msra.mxu0 0.0
    %1078 = vmatprep.subr.mxu0 0.0
    %1079 = vmatpush2.msra.mxu0 0.0
    %1080 = vmatprep.mubr.f32.mxu0 0.0
    %1081 = vmatmul.mubr.f32.gmra.mxu0 %v1011
    %v1082 = vpop.f32.mrf.mxu0
    %v1083 = vadd.f32 %v1008, %v1082
    %v1084 = vpop.f32.mrf.mxu0
    %1085 = vmatprep.mubr.f32.mxu0 0.0
    %1086 = vmatmul.mubr.f32.gmra.mxu0 %v1014
    %v1087 = vpop.f32.mrf.mxu0
    %v1088 = vadd.f32 %v1008, %v1087
    %v1089 = vpop.f32.mrf.mxu0
    %1090 = vdwg.mxu0
    %1093 = vrot.lane.b32.xlu0 %v1083, 2
    %v1094 = vpop.permute.xlu0 %1093
    %1095 = vrot.lane.b32.xlu0 %v1088, 2
    %v1096 = vpop.permute.xlu0 %1095
    %vm1099 = vcmask 23568
    %1100 = vst.msk [vmem:[%s7] sm:$0xff] %vm1099, %v1094
    %1101 = vst.msk [vmem:[%s7 + $0x8] sm:$0xff] %vm1099, %v1096
    %s1102 = scalar_lea.vmem %s1, 96
    %v1103 = vld [vmem:[%s1102] sm:$0xff]
    %v1104 = vld [vmem:[%s1102 + $0x8] sm:$0xff]
    %v1105 = vld [vmem:[%s1102 + $0x10] sm:$0xff]
    %v1106 = vld [vmem:[%s1102 + $0x18] sm:$0xff]
    %s1107 = scalar_lea.vmem %s2, 3
    %v1108 = vld [vmem:[%s1107] sm:$0x1]
    %v1110 = vlaneseq
    %v1111 = vshrl.u32 %v1110, 7
    %v1112 = vsub.s32 0, %v1111
    %v1113 = vrot.slane %v1108, %v1112
    %1115 = vmatprep.subr.mxu0 0.0
    %1116 = vmatpush1.msra.mxu0 0.0
    %1117 = vmatprep.subr.mxu0 0.0
    %1118 = vmatpush1.msra.mxu0 0.0
    %1119 = vmatprep.subr.mxu0 0.0
    %1120 = vmatpush1.msra.mxu0 0.0
    %1121 = vmatprep.subr.mxu0 0.0
    %1122 = vmatpush1.msra.mxu0 0.0
    %1123 = vmatprep.subr.mxu0 0.0
    %1124 = vmatpush1.msra.mxu0 0.0
    %1125 = vmatprep.subr.mxu0 0.0
    %1126 = vmatpush1.msra.mxu0 0.0
    %1127 = vmatprep.subr.mxu0 0.0
    %1128 = vmatpush1.msra.mxu0 0.0
    %1129 = vmatprep.subr.mxu0 0.0
    %1130 = vmatpush1.msra.mxu0 0.0
    %1131 = vmatprep.subr.mxu0 0.0
    %1132 = vmatpush1.msra.mxu0 0.0
    %1133 = vmatprep.subr.mxu0 0.0
    %1134 = vmatpush1.msra.mxu0 0.0
    %1135 = vmatprep.subr.mxu0 0.0
    %1136 = vmatpush1.msra.mxu0 0.0
    %1137 = vmatprep.subr.mxu0 0.0
    %1138 = vmatpush1.msra.mxu0 0.0
    %1139 = vmatprep.subr.mxu0 0.0
    %1140 = vmatpush1.msra.mxu0 %v1106
    %1141 = vmatprep.subr.mxu0 0.0
    %1142 = vmatpush1.msra.mxu0 %v1105
    %1143 = vmatprep.subr.mxu0 0.0
    %1144 = vmatpush1.msra.mxu0 %v1104
    %1145 = vmatprep.subr.mxu0 0.0
    %1146 = vmatpush1.msra.mxu0 %v1103
    %1147 = vmatprep.subr.mxu0 0.0
    %1148 = vmatpush2.msra.mxu0 0.0
    %1149 = vmatprep.subr.mxu0 0.0
    %1150 = vmatpush2.msra.mxu0 0.0
    %1151 = vmatprep.subr.mxu0 0.0
    %1152 = vmatpush2.msra.mxu0 0.0
    %1153 = vmatprep.subr.mxu0 0.0
    %1154 = vmatpush2.msra.mxu0 0.0
    %1155 = vmatprep.subr.mxu0 0.0
    %1156 = vmatpush2.msra.mxu0 0.0
    %1157 = vmatprep.subr.mxu0 0.0
    %1158 = vmatpush2.msra.mxu0 0.0
    %1159 = vmatprep.subr.mxu0 0.0
    %1160 = vmatpush2.msra.mxu0 0.0
    %1161 = vmatprep.subr.mxu0 0.0
    %1162 = vmatpush2.msra.mxu0 0.0
    %1163 = vmatprep.subr.mxu0 0.0
    %1164 = vmatpush2.msra.mxu0 0.0
    %1165 = vmatprep.subr.mxu0 0.0
    %1166 = vmatpush2.msra.mxu0 0.0
    %1167 = vmatprep.subr.mxu0 0.0
    %1168 = vmatpush2.msra.mxu0 0.0
    %1169 = vmatprep.subr.mxu0 0.0
    %1170 = vmatpush2.msra.mxu0 0.0
    %1171 = vmatprep.subr.mxu0 0.0
    %1172 = vmatpush2.msra.mxu0 0.0
    %1173 = vmatprep.subr.mxu0 0.0
    %1174 = vmatpush2.msra.mxu0 0.0
    %1175 = vmatprep.subr.mxu0 0.0
    %1176 = vmatpush2.msra.mxu0 0.0
    %1177 = vmatprep.subr.mxu0 0.0
    %1178 = vmatpush2.msra.mxu0 0.0
    %1179 = vmatprep.mubr.f32.mxu0 0.0
    %1180 = vmatmul.mubr.f32.gmra.mxu0 %v69
    %v1181 = vpop.f32.mrf.mxu0
    %v1182 = vadd.f32 %v1113, %v1181
    %v1183 = vpop.f32.mrf.mxu0
    %1184 = vmatprep.mubr.f32.mxu0 0.0
    %1185 = vmatmul.mubr.f32.gmra.mxu0 %v72
    %v1186 = vpop.f32.mrf.mxu0
    %v1187 = vadd.f32 %v1113, %v1186
    %v1188 = vpop.f32.mrf.mxu0
    %1189 = vdwg.mxu0
    %v1190 = vmax.f32 %v1182, 0.0
    %v1191 = vmax.f32 %v1187, 0.0
    %v1192 = vand.u32 2147483647, %v1182
    %v1193 = vand.u32 2147483647, %v1187
    %v1194 = vsub.f32 0.0, %v1192
    %v1195 = vsub.f32 0.0, %v1193
    %v1196 = vmul.f32 %v1194, 1.442695
    %v1197 = vpow.pop %v1196
    %v1198 = vmul.f32 %v1195, 1.442695
    %v1199 = vpow.pop %v1198
    %v1200 = vadd.f32 %v1197, 1.0
    %v1201 = vlog2.pop %v1200
    %v1202 = vmul.f32 %v1201, 0.6931472
    %v1203 = vmul.f32 -0.5, %v1197
    %v1204 = vadd.f32 %v1203, 1.0
    %v1205 = vmul.f32 %v1204, %v1197
    %v1206 = vand.u32 2147483647, %v1197
    %vm1207 = vcmp.lt.f32.partialorder %v1206, 0.0004427343
    %v1208 = vsel %vm1207, %v1205, %v1202
    %v1209 = vadd.f32 %v1199, 1.0
    %v1210 = vlog2.pop %v1209
    %v1211 = vmul.f32 %v1210, 0.6931472
    %v1212 = vmul.f32 -0.5, %v1199
    %v1213 = vadd.f32 %v1212, 1.0
    %v1214 = vmul.f32 %v1213, %v1199
    %v1215 = vand.u32 2147483647, %v1199
    %vm1216 = vcmp.lt.f32.partialorder %v1215, 0.0004427343
    %v1217 = vsel %vm1216, %v1214, %v1211
    %v1218 = vadd.f32 %v1190, %v1208
    %v1219 = vadd.f32 %v1191, %v1217
    %v1220 = vsub.f32 %v1218, 0.6931472
    %v1221 = vsub.f32 %v1219, 0.6931472
    %s1222 = scalar_lea.vmem [#allocation4], 96
    %v1223 = vld [vmem:[%s1222] sm:$0xff]
    %v1224 = vld [vmem:[%s1222 + $0x8] sm:$0xff]
    %v1225 = vld [vmem:[%s1222 + $0x10] sm:$0xff]
    %v1226 = vld [vmem:[%s1222 + $0x18] sm:$0xff]
    %s1227 = scalar_lea.vmem %s4, 3
    %v1228 = vld [vmem:[%s1227] sm:$0x1]
    %v1230 = vlaneseq
    %v1231 = vshrl.u32 %v1230, 7
    %v1232 = vsub.s32 0, %v1231
    %v1233 = vrot.slane %v1228, %v1232
    %v1236 = vsel %vm67, %v1220, 0
    %v1239 = vsel %vm67, %v1221, 0
    %1241 = vmatprep.subr.mxu0 0.0
    %1242 = vmatpush1.msra.mxu0 0.0
    %1243 = vmatprep.subr.mxu0 0.0
    %1244 = vmatpush1.msra.mxu0 0.0
    %1245 = vmatprep.subr.mxu0 0.0
    %1246 = vmatpush1.msra.mxu0 0.0
    %1247 = vmatprep.subr.mxu0 0.0
    %1248 = vmatpush1.msra.mxu0 0.0
    %1249 = vmatprep.subr.mxu0 0.0
    %1250 = vmatpush1.msra.mxu0 0.0
    %1251 = vmatprep.subr.mxu0 0.0
    %1252 = vmatpush1.msra.mxu0 0.0
    %1253 = vmatprep.subr.mxu0 0.0
    %1254 = vmatpush1.msra.mxu0 0.0
    %1255 = vmatprep.subr.mxu0 0.0
    %1256 = vmatpush1.msra.mxu0 0.0
    %1257 = vmatprep.subr.mxu0 0.0
    %1258 = vmatpush1.msra.mxu0 0.0
    %1259 = vmatprep.subr.mxu0 0.0
    %1260 = vmatpush1.msra.mxu0 0.0
    %1261 = vmatprep.subr.mxu0 0.0
    %1262 = vmatpush1.msra.mxu0 0.0
    %1263 = vmatprep.subr.mxu0 0.0
    %1264 = vmatpush1.msra.mxu0 0.0
    %1265 = vmatprep.subr.mxu0 0.0
    %1266 = vmatpush1.msra.mxu0 %v1226
    %1267 = vmatprep.subr.mxu0 0.0
    %1268 = vmatpush1.msra.mxu0 %v1225
    %1269 = vmatprep.subr.mxu0 0.0
    %1270 = vmatpush1.msra.mxu0 %v1224
    %1271 = vmatprep.subr.mxu0 0.0
    %1272 = vmatpush1.msra.mxu0 %v1223
    %1273 = vmatprep.subr.mxu0 0.0
    %1274 = vmatpush2.msra.mxu0 0.0
    %1275 = vmatprep.subr.mxu0 0.0
    %1276 = vmatpush2.msra.mxu0 0.0
    %1277 = vmatprep.subr.mxu0 0.0
    %1278 = vmatpush2.msra.mxu0 0.0
    %1279 = vmatprep.subr.mxu0 0.0
    %1280 = vmatpush2.msra.mxu0 0.0
    %1281 = vmatprep.subr.mxu0 0.0
    %1282 = vmatpush2.msra.mxu0 0.0
    %1283 = vmatprep.subr.mxu0 0.0
    %1284 = vmatpush2.msra.mxu0 0.0
    %1285 = vmatprep.subr.mxu0 0.0
    %1286 = vmatpush2.msra.mxu0 0.0
    %1287 = vmatprep.subr.mxu0 0.0
    %1288 = vmatpush2.msra.mxu0 0.0
    %1289 = vmatprep.subr.mxu0 0.0
    %1290 = vmatpush2.msra.mxu0 0.0
    %1291 = vmatprep.subr.mxu0 0.0
    %1292 = vmatpush2.msra.mxu0 0.0
    %1293 = vmatprep.subr.mxu0 0.0
    %1294 = vmatpush2.msra.mxu0 0.0
    %1295 = vmatprep.subr.mxu0 0.0
    %1296 = vmatpush2.msra.mxu0 0.0
    %1297 = vmatprep.subr.mxu0 0.0
    %1298 = vmatpush2.msra.mxu0 0.0
    %1299 = vmatprep.subr.mxu0 0.0
    %1300 = vmatpush2.msra.mxu0 0.0
    %1301 = vmatprep.subr.mxu0 0.0
    %1302 = vmatpush2.msra.mxu0 0.0
    %1303 = vmatprep.subr.mxu0 0.0
    %1304 = vmatpush2.msra.mxu0 0.0
    %1305 = vmatprep.mubr.f32.mxu0 0.0
    %1306 = vmatmul.mubr.f32.gmra.mxu0 %v1236
    %v1307 = vpop.f32.mrf.mxu0
    %v1308 = vadd.f32 %v1233, %v1307
    %v1309 = vpop.f32.mrf.mxu0
    %1310 = vmatprep.mubr.f32.mxu0 0.0
    %1311 = vmatmul.mubr.f32.gmra.mxu0 %v1239
    %v1312 = vpop.f32.mrf.mxu0
    %v1313 = vadd.f32 %v1233, %v1312
    %v1314 = vpop.f32.mrf.mxu0
    %1315 = vdwg.mxu0
    %v1316 = vmax.f32 %v1308, 0.0
    %v1317 = vmax.f32 %v1313, 0.0
    %v1318 = vand.u32 2147483647, %v1308
    %v1319 = vand.u32 2147483647, %v1313
    %v1320 = vsub.f32 0.0, %v1318
    %v1321 = vsub.f32 0.0, %v1319
    %v1322 = vmul.f32 %v1320, 1.442695
    %v1323 = vpow.pop %v1322
    %v1324 = vmul.f32 %v1321, 1.442695
    %v1325 = vpow.pop %v1324
    %v1326 = vadd.f32 %v1323, 1.0
    %v1327 = vlog2.pop %v1326
    %v1328 = vmul.f32 %v1327, 0.6931472
    %v1329 = vmul.f32 -0.5, %v1323
    %v1330 = vadd.f32 %v1329, 1.0
    %v1331 = vmul.f32 %v1330, %v1323
    %v1332 = vand.u32 2147483647, %v1323
    %vm1333 = vcmp.lt.f32.partialorder %v1332, 0.0004427343
    %v1334 = vsel %vm1333, %v1331, %v1328
    %v1335 = vadd.f32 %v1325, 1.0
    %v1336 = vlog2.pop %v1335
    %v1337 = vmul.f32 %v1336, 0.6931472
    %v1338 = vmul.f32 -0.5, %v1325
    %v1339 = vadd.f32 %v1338, 1.0
    %v1340 = vmul.f32 %v1339, %v1325
    %v1341 = vand.u32 2147483647, %v1325
    %vm1342 = vcmp.lt.f32.partialorder %v1341, 0.0004427343
    %v1343 = vsel %vm1342, %v1340, %v1337
    %v1344 = vadd.f32 %v1316, %v1334
    %v1345 = vadd.f32 %v1317, %v1343
    %v1346 = vsub.f32 %v1344, 0.6931472
    %v1347 = vsub.f32 %v1345, 0.6931472
    %s1348 = scalar_lea.vmem %s5, 96
    %v1349 = vld [vmem:[%s1348] sm:$0xff]
    %v1350 = vld [vmem:[%s1348 + $0x8] sm:$0xff]
    %v1351 = vld [vmem:[%s1348 + $0x10] sm:$0xff]
    %v1352 = vld [vmem:[%s1348 + $0x18] sm:$0xff]
    %s1353 = scalar_lea.vmem %s6, 3
    %v1354 = vld [vmem:[%s1353] sm:$0x1]
    %v1356 = vlaneseq
    %v1357 = vshrl.u32 %v1356, 7
    %v1358 = vsub.s32 0, %v1357
    %v1359 = vrot.slane %v1354, %v1358
    %v1362 = vsel %vm67, %v1346, 0
    %v1365 = vsel %vm67, %v1347, 0
    %1367 = vmatprep.subr.mxu0 0.0
    %1368 = vmatpush1.msra.mxu0 0.0
    %1369 = vmatprep.subr.mxu0 0.0
    %1370 = vmatpush1.msra.mxu0 0.0
    %1371 = vmatprep.subr.mxu0 0.0
    %1372 = vmatpush1.msra.mxu0 0.0
    %1373 = vmatprep.subr.mxu0 0.0
    %1374 = vmatpush1.msra.mxu0 0.0
    %1375 = vmatprep.subr.mxu0 0.0
    %1376 = vmatpush1.msra.mxu0 0.0
    %1377 = vmatprep.subr.mxu0 0.0
    %1378 = vmatpush1.msra.mxu0 0.0
    %1379 = vmatprep.subr.mxu0 0.0
    %1380 = vmatpush1.msra.mxu0 0.0
    %1381 = vmatprep.subr.mxu0 0.0
    %1382 = vmatpush1.msra.mxu0 0.0
    %1383 = vmatprep.subr.mxu0 0.0
    %1384 = vmatpush1.msra.mxu0 0.0
    %1385 = vmatprep.subr.mxu0 0.0
    %1386 = vmatpush1.msra.mxu0 0.0
    %1387 = vmatprep.subr.mxu0 0.0
    %1388 = vmatpush1.msra.mxu0 0.0
    %1389 = vmatprep.subr.mxu0 0.0
    %1390 = vmatpush1.msra.mxu0 0.0
    %1391 = vmatprep.subr.mxu0 0.0
    %1392 = vmatpush1.msra.mxu0 %v1352
    %1393 = vmatprep.subr.mxu0 0.0
    %1394 = vmatpush1.msra.mxu0 %v1351
    %1395 = vmatprep.subr.mxu0 0.0
    %1396 = vmatpush1.msra.mxu0 %v1350
    %1397 = vmatprep.subr.mxu0 0.0
    %1398 = vmatpush1.msra.mxu0 %v1349
    %1399 = vmatprep.subr.mxu0 0.0
    %1400 = vmatpush2.msra.mxu0 0.0
    %1401 = vmatprep.subr.mxu0 0.0
    %1402 = vmatpush2.msra.mxu0 0.0
    %1403 = vmatprep.subr.mxu0 0.0
    %1404 = vmatpush2.msra.mxu0 0.0
    %1405 = vmatprep.subr.mxu0 0.0
    %1406 = vmatpush2.msra.mxu0 0.0
    %1407 = vmatprep.subr.mxu0 0.0
    %1408 = vmatpush2.msra.mxu0 0.0
    %1409 = vmatprep.subr.mxu0 0.0
    %1410 = vmatpush2.msra.mxu0 0.0
    %1411 = vmatprep.subr.mxu0 0.0
    %1412 = vmatpush2.msra.mxu0 0.0
    %1413 = vmatprep.subr.mxu0 0.0
    %1414 = vmatpush2.msra.mxu0 0.0
    %1415 = vmatprep.subr.mxu0 0.0
    %1416 = vmatpush2.msra.mxu0 0.0
    %1417 = vmatprep.subr.mxu0 0.0
    %1418 = vmatpush2.msra.mxu0 0.0
    %1419 = vmatprep.subr.mxu0 0.0
    %1420 = vmatpush2.msra.mxu0 0.0
    %1421 = vmatprep.subr.mxu0 0.0
    %1422 = vmatpush2.msra.mxu0 0.0
    %1423 = vmatprep.subr.mxu0 0.0
    %1424 = vmatpush2.msra.mxu0 0.0
    %1425 = vmatprep.subr.mxu0 0.0
    %1426 = vmatpush2.msra.mxu0 0.0
    %1427 = vmatprep.subr.mxu0 0.0
    %1428 = vmatpush2.msra.mxu0 0.0
    %1429 = vmatprep.subr.mxu0 0.0
    %1430 = vmatpush2.msra.mxu0 0.0
    %1431 = vmatprep.mubr.f32.mxu0 0.0
    %1432 = vmatmul.mubr.f32.gmra.mxu0 %v1362
    %v1433 = vpop.f32.mrf.mxu0
    %v1434 = vadd.f32 %v1359, %v1433
    %v1435 = vpop.f32.mrf.mxu0
    %1436 = vmatprep.mubr.f32.mxu0 0.0
    %1437 = vmatmul.mubr.f32.gmra.mxu0 %v1365
    %v1438 = vpop.f32.mrf.mxu0
    %v1439 = vadd.f32 %v1359, %v1438
    %v1440 = vpop.f32.mrf.mxu0
    %1441 = vdwg.mxu0
    %1444 = vrot.lane.b32.xlu0 %v1434, 3
    %v1445 = vpop.permute.xlu0 %1444
    %1446 = vrot.lane.b32.xlu0 %v1439, 3
    %v1447 = vpop.permute.xlu0 %1446
    %vm1450 = vcmask 31768
    %1451 = vst.msk [vmem:[%s7] sm:$0xff] %vm1450, %v1445
    %1452 = vst.msk [vmem:[%s7 + $0x8] sm:$0xff] %vm1450, %v1447
    // Predicated region
    $region38: #{tpu_custom_call.1} parent=1 // pred_check
      _
    $region39: #{tpu_custom_call.1} parent=1 // pred_check_branch
      %1454 = sbr.rel (0) target = $region41
    $region40: #{tpu_custom_call.1} parent=1 // pred_region
      _
    $region41: #{tpu_custom_call.1} parent=1 // pred_fallthru
      _
    // Predicated region
    $region42: #{tpu_custom_call.1} parent=1 // pred_check
      _
    $region43: #{tpu_custom_call.1} parent=1 // pred_check_branch
      %1456 = sbr.rel (0) target = $region45
    $region44: #{tpu_custom_call.1} parent=1 // pred_region
      _
    $region45: #{tpu_custom_call.1} parent=1 // pred_fallthru
      _
    %1457 = vsyncpa [#allocation3], 1
    %1458 = vsyncpa [#allocation5], 1

</llo_original>
